<compile_context>
chip_gen: v7x
topology: tpu7x:2x2x1
jax: 0.10.0
libtpu: 0.0.40
codegen_flags: <defaults>
</compile_context>

<pallas_src>
import functools

import jax
import jax.numpy as jnp
from jax import lax
from jax.experimental import pallas as pl
from jax.experimental.pallas import tpu as pltpu


LANE = 128                      # batch lanes per compute chunk (one full lane row)
VMEM_BUDGET_BYTES = 12 << 20    # double-buffered in+out per grid step; safe on v5e/v6e/v7x


def _cdiv(a, b):
    return -(-a // b)


def _detect_num_tensorcores():
    """Best-effort TensorCore count per chip (v7x has 2; v5e/v6e have 1)."""
    try:
        kind = jax.devices()[0].device_kind.lower()
    except Exception:
        return 1
    return 2 if "v7" in kind else 1


def _gauss_jordan_inverse_lanes(cov, k, inv0, onehots):
    """Invert a lane-batched stack of SPD k x k matrices.

    cov: (k, k, C) f32 with the batch on the last (lane) axis.
    inv0: (k, k, C) identity (pre-broadcast, hoisted out of the chunk loop).
    onehots[p]: (k, 1, 1) one-hot of row p.
    Fully unrolled over the k pivots (k is a Python int).  No pivoting: the
    nugget tau*sigma^2 keeps the SPD covariance well conditioned.
    """
    M = cov
    Inv = inv0
    for p in range(k):
        piv = M[p : p + 1, p : p + 1, :]               # (1, 1, C)
        rinv = pl.reciprocal(piv)                      # exact EUP reciprocal
        piv_row_I = Inv[p : p + 1, :, :] * rinv        # (1, k, C)
        # Fold the pivot-row normalization into the factor: row p gets
        # factor = piv - 1, so row_p - factor * row_p/piv == row_p/piv, and no
        # explicit pivot-row write-back (jnp.where) is needed.
        factor = M[:, p : p + 1, :] - onehots[p]       # (k, 1, C)
        Inv = Inv - factor * piv_row_I
        if p < k - 1:  # the last M update is dead work
            piv_row_M = M[p : p + 1, :, :] * rinv      # (1, k, C)
            M = M - factor * piv_row_M
    return Inv


def _inv_cov_kernel(pos_ref, out_ref, *, k, d, n_chunks, sigma_sq, phi, tau,
                    interleave):
    # pos_ref: (n_chunks, k, d, LANE) ; out_ref: (n_chunks, k, k, LANE)
    # Batch lives on the last (lane) axis.
    eye_kk1 = (
        lax.broadcasted_iota(jnp.int32, (k, k, 1), 0)
        == lax.broadcasted_iota(jnp.int32, (k, k, 1), 1)
    ).astype(jnp.float32)
    # Loop-invariant broadcasts hoisted out of the chunk loop (not CSE'd by JAX).
    inv0 = jnp.broadcast_to(eye_kk1, (k, k, LANE))
    nugget = jnp.broadcast_to((tau * sigma_sq) * eye_kk1, (k, k, LANE))
    row_idx = lax.broadcasted_iota(jnp.int32, (k, 1, 1), 0)
    onehots = [(row_idx == p).astype(jnp.float32) for p in range(k)]

    def compute_chunk(c):
        pos = pos_ref[c].astype(jnp.float32)           # (k, d, LANE)
        # Pairwise squared distances by direct differences, unrolled over d:
        # exact zero on the diagonal, no cancellation, no MXU.
        x = pos[:, 0, :]                               # (k, LANE)
        diff = x[:, None, :] - x[None, :, :]           # (k, k, LANE)
        dist2 = diff * diff
        for dd in range(1, d):
            x = pos[:, dd, :]
            diff = x[:, None, :] - x[None, :, :]
            dist2 = dist2 + diff * diff
        dists = jnp.sqrt(dist2)
        # Exponential covariance family with nuggets.
        cov = sigma_sq * jnp.exp(-phi * dists) + nugget    # (k, k, LANE)
        return _gauss_jordan_inverse_lanes(cov, k, inv0, onehots)

    if interleave >= 2:
        # Two independent lane-chunks per iteration: the VALU work of one
        # elimination hides the serial pivot-reciprocal (EUP) latency of the
        # other.  Tail chunk handled statically (n_chunks is a Python int).
        n_pairs = n_chunks // 2
        if n_pairs > 0:
            def pair_body(i, carry):
                c0 = i * 2
                inv_a = compute_chunk(c0)
                inv_b = compute_chunk(c0 + 1)
                out_ref[c0] = inv_a.astype(out_ref.dtype)
                out_ref[c0 + 1] = inv_b.astype(out_ref.dtype)
                return carry

            lax.fori_loop(0, n_pairs, pair_body, 0)
        if n_chunks % 2 == 1:
            out_ref[n_chunks - 1] = compute_chunk(n_chunks - 1).astype(out_ref.dtype)
    else:
        def body(c, carry):
            out_ref[c] = compute_chunk(c).astype(out_ref.dtype)
            return carry

        lax.fori_loop(0, n_chunks, body, 0)


class InverseCovMat:
    """JAX/Pallas port of geospaNN.InverseCovMat (no learned parameters)."""

    def __init__(self, neighbor_size, coord_dimension, theta,
                 batch_tile=8192, num_tensorcores=None, lane_batched_output=False):
        self.neighbor_size = int(neighbor_size)
        self.coord_dimension = int(coord_dimension)
        self.theta = tuple(float(t) for t in theta)
        # Batches moved per grid step (rounded down to a multiple of LANE).
        self.batch_tile = max(LANE, (int(batch_tile) // LANE) * LANE)
        self.num_tensorcores = (
            _detect_num_tensorcores() if num_tensorcores is None else int(num_tensorcores)
        )
        # If the consumer can work in the lane-batched (nb, k, k, LANE) layout,
        # set this to skip the wrapper-side relayout (saves ~2x output HBM traffic).
        self.lane_batched_output = bool(lane_batched_output)

    def __call__(self, neighbor_positions, edge_list=None):
        # edge_list is unused by the reference forward pass; kept for API parity.
        k, d = self.neighbor_size, self.coord_dimension
        sigma_sq, phi, tau = self.theta

        pos = jnp.asarray(neighbor_positions, dtype=jnp.float32).reshape(-1, k, d)
        b = pos.shape[0]
        n_blocks = max(1, _cdiv(b, LANE))   # total 128-lane compute chunks

        # --- Tiling: biggest tile that fits the VMEM budget, amortizing the
        # ~0.35 us per-grid-step overhead.  Budget is double-buffered in+out.
        per_chunk_bytes = (k * d + k * k) * LANE * 4
        bpt_cap = max(1, VMEM_BUDGET_BYTES // (2 * per_chunk_bytes))
        bpt = max(1, min(self.batch_tile // LANE, bpt_cap, n_blocks))
        grid_n = _cdiv(n_blocks, bpt)

        # Multi-TensorCore chips (v7x): aim for >= 2 balanced steps per core so
        # the pipeline warms up on each core.  Single-TC chips keep the largest
        # tile (no pointless split).
        if self.num_tensorcores > 1 and n_blocks >= self.num_tensorcores:
            min_steps = self.num_tensorcores * (
                2 if n_blocks >= 2 * self.num_tensorcores else 1
            )
            if grid_n < min_steps:
                bpt = max(1, _cdiv(n_blocks, min_steps))
                grid_n = _cdiv(n_blocks, bpt)

        nb = grid_n * bpt              # total 128-lane chunks after padding
        b_pad = nb * LANE
        if b_pad != b:
            pos = jnp.pad(pos, ((0, b_pad - b), (0, 0), (0, 0)))

        # Batch-in-lanes layout: (nb, LANE, k, d) -> (nb, k, d, LANE).
        pos_blk = jnp.transpose(pos.reshape(nb, LANE, k, d), (0, 2, 3, 1))

        # Vreg-pressure guard: interleaving doubles live M+Inv state
        # (2*k*ceil(k/8) vregs each at C=128), so skip it for larger k.
        interleave = 2 if k <= 10 else 1

        kernel = functools.partial(
            _inv_cov_kernel, k=k, d=d, n_chunks=bpt,
            sigma_sq=sigma_sq, phi=phi, tau=tau, interleave=interleave,
        )

        out_blk = pl.pallas_call(
            kernel,
            out_shape=jax.ShapeDtypeStruct((nb, k, k, LANE), jnp.float32),
            grid=(grid_n,),
            in_specs=[pl.BlockSpec((bpt, k, d, LANE), lambda i: (i, 0, 0, 0))],
            out_specs=pl.BlockSpec((bpt, k, k, LANE), lambda i: (i, 0, 0, 0)),
            compiler_params=pltpu.CompilerParams(
                dimension_semantics=("parallel",)
            ),
        )(pos_blk)

        if self.lane_batched_output:
            # Caller accepts the lane-batched layout; valid rows are the first
            # `b` batches after un-interleaving.  Skips the relayout below.
            return out_blk

        # Back to the module's (batch, k, k) layout (wrapper-side layout plumbing).
        out = jnp.transpose(out_blk, (0, 3, 1, 2)).reshape(b_pad, k, k)
        return out[:b]


if __name__ == "__main__":
    # Small, deterministic example consistent with the module's forward.
    batch = 256
    neighbor_size = 8      # k
    coord_dimension = 2    # d
    theta = (1.0, 0.5, 0.1)  # (sigma^2, phi, tau)

    key = jax.random.PRNGKey(0)
    # Positions flattened per sample, as geospaNN feeds them: (batch, k*d).
    neighbor_positions = jax.random.uniform(
        key, (batch, neighbor_size * coord_dimension), dtype=jnp.float32
    )
    edge_list = None  # unused by forward

    model = InverseCovMat(neighbor_size, coord_dimension, theta)
    out = jax.block_until_ready(model(neighbor_positions, edge_list))

    # Plain-JAX reference (same math, jnp.linalg.inv).
    sigma_sq, phi, tau = theta
    pos = neighbor_positions.reshape(-1, neighbor_size, coord_dimension)
    diff = pos[:, :, None, :] - pos[:, None, :, :]
    dists = jnp.sqrt(jnp.sum(diff * diff, axis=-1))
    cov = sigma_sq * jnp.exp(-phi * dists) + (tau * sigma_sq) * jnp.eye(neighbor_size)
    ref = jnp.linalg.inv(cov)

    assert out.shape == (batch, neighbor_size, neighbor_size)
    err = float(jnp.max(jnp.abs(out - ref)))
    assert err < 2e-3, f"mismatch vs jnp.linalg.inv reference (max abs err {err:.2e})"
    print("KERNEL_OK")
</pallas_src>

<mosaic_0001>
module attributes {stable_mosaic.version = 11 : i64} {
  func.func @_inv_cov_kernel(%arg0: i32, %arg1: memref<2x8x2x128xf32, #tpu.memory_space<vmem>>, %arg2: memref<2x8x8x128xf32, #tpu.memory_space<vmem>>) attributes {dimension_semantics = [#tpu.dimension_semantics<parallel>], iteration_bounds = array<i64: 1>, scalar_prefetch = 0 : i64, scratch_operands = 0 : i64, tpu.core_type = #tpu.core_type<tc>, window_params = [{transform_indices = @transform_0, window_bounds = array<i64: 2, 8, 2, 128>}, {transform_indices = @transform_1, window_bounds = array<i64: 2, 8, 8, 128>}]} {
    %0 = tpu.iota {dimensions = array<i32: 0>} : vector<8x8x1xi32>
    %1 = tpu.iota {dimensions = array<i32: 1>} : vector<8x8x1xi32>
    %2 = arith.cmpi eq, %0, %1 : vector<8x8x1xi32>
    %3 = arith.extui %2 : vector<8x8x1xi1> to vector<8x8x1xi32>
    %4 = arith.sitofp %3 : vector<8x8x1xi32> to vector<8x8x1xf32>
    %5 = vector.shape_cast %4 : vector<8x8x1xf32> to vector<8x8x1xf32>
    %6 = vector.broadcast %5 : vector<8x8x1xf32> to vector<8x8x128xf32>
    %cst = arith.constant 1.000000e-01 : f32
    %7 = vector.broadcast %cst : f32 to vector<8x8x1xf32>
    %8 = arith.mulf %7, %4 : vector<8x8x1xf32>
    %9 = vector.shape_cast %8 : vector<8x8x1xf32> to vector<8x8x1xf32>
    %10 = vector.broadcast %9 : vector<8x8x1xf32> to vector<8x8x128xf32>
    %11 = tpu.iota {dimensions = array<i32: 0>} : vector<8x1x1xi32>
    %c0_i32 = arith.constant 0 : i32
    %12 = vector.broadcast %c0_i32 : i32 to vector<8x1x1xi32>
    %13 = arith.cmpi eq, %11, %12 : vector<8x1x1xi32>
    %14 = arith.extui %13 : vector<8x1x1xi1> to vector<8x1x1xi32>
    %15 = arith.sitofp %14 : vector<8x1x1xi32> to vector<8x1x1xf32>
    %c1_i32 = arith.constant 1 : i32
    %16 = vector.broadcast %c1_i32 : i32 to vector<8x1x1xi32>
    %17 = arith.cmpi eq, %11, %16 : vector<8x1x1xi32>
    %18 = arith.extui %17 : vector<8x1x1xi1> to vector<8x1x1xi32>
    %19 = arith.sitofp %18 : vector<8x1x1xi32> to vector<8x1x1xf32>
    %c2_i32 = arith.constant 2 : i32
    %20 = vector.broadcast %c2_i32 : i32 to vector<8x1x1xi32>
    %21 = arith.cmpi eq, %11, %20 : vector<8x1x1xi32>
    %22 = arith.extui %21 : vector<8x1x1xi1> to vector<8x1x1xi32>
    %23 = arith.sitofp %22 : vector<8x1x1xi32> to vector<8x1x1xf32>
    %c3_i32 = arith.constant 3 : i32
    %24 = vector.broadcast %c3_i32 : i32 to vector<8x1x1xi32>
    %25 = arith.cmpi eq, %11, %24 : vector<8x1x1xi32>
    %26 = arith.extui %25 : vector<8x1x1xi1> to vector<8x1x1xi32>
    %27 = arith.sitofp %26 : vector<8x1x1xi32> to vector<8x1x1xf32>
    %c4_i32 = arith.constant 4 : i32
    %28 = vector.broadcast %c4_i32 : i32 to vector<8x1x1xi32>
    %29 = arith.cmpi eq, %11, %28 : vector<8x1x1xi32>
    %30 = arith.extui %29 : vector<8x1x1xi1> to vector<8x1x1xi32>
    %31 = arith.sitofp %30 : vector<8x1x1xi32> to vector<8x1x1xf32>
    %c5_i32 = arith.constant 5 : i32
    %32 = vector.broadcast %c5_i32 : i32 to vector<8x1x1xi32>
    %33 = arith.cmpi eq, %11, %32 : vector<8x1x1xi32>
    %34 = arith.extui %33 : vector<8x1x1xi1> to vector<8x1x1xi32>
    %35 = arith.sitofp %34 : vector<8x1x1xi32> to vector<8x1x1xf32>
    %c6_i32 = arith.constant 6 : i32
    %36 = vector.broadcast %c6_i32 : i32 to vector<8x1x1xi32>
    %37 = arith.cmpi eq, %11, %36 : vector<8x1x1xi32>
    %38 = arith.extui %37 : vector<8x1x1xi1> to vector<8x1x1xi32>
    %39 = arith.sitofp %38 : vector<8x1x1xi32> to vector<8x1x1xf32>
    %c7_i32 = arith.constant 7 : i32
    %40 = vector.broadcast %c7_i32 : i32 to vector<8x1x1xi32>
    %41 = arith.cmpi eq, %11, %40 : vector<8x1x1xi32>
    %42 = arith.extui %41 : vector<8x1x1xi1> to vector<8x1x1xi32>
    %43 = arith.sitofp %42 : vector<8x1x1xi32> to vector<8x1x1xf32>
    %c0_i32_0 = arith.constant 0 : i32
    %c2_i32_1 = arith.constant 2 : i32
    %44 = arith.muli %c0_i32_0, %c2_i32_1 : i32
    %45 = arith.index_cast %44 : i32 to index
    %c0 = arith.constant 0 : index
    %c0_2 = arith.constant 0 : index
    %c0_3 = arith.constant 0 : index
    %46 = vector.load %arg1[%45, %c0, %c0_2, %c0_3] : memref<2x8x2x128xf32, #tpu.memory_space<vmem>>, vector<1x8x2x128xf32>
    %47 = vector.shape_cast %46 : vector<1x8x2x128xf32> to vector<8x2x128xf32>
    %48 = vector.extract_strided_slice %47 {offsets = [0, 0, 0], sizes = [8, 1, 128], strides = [1, 1, 1]} : vector<8x2x128xf32> to vector<8x1x128xf32>
    %49 = vector.shape_cast %48 : vector<8x1x128xf32> to vector<8x128xf32>
    %50 = vector.shape_cast %49 : vector<8x128xf32> to vector<8x1x128xf32>
    %51 = vector.shape_cast %49 : vector<8x128xf32> to vector<1x8x128xf32>
    %52 = vector.broadcast %50 : vector<8x1x128xf32> to vector<8x8x128xf32>
    %53 = vector.broadcast %51 : vector<1x8x128xf32> to vector<8x8x128xf32>
    %54 = arith.subf %52, %53 : vector<8x8x128xf32>
    %55 = arith.mulf %54, %54 : vector<8x8x128xf32>
    %56 = vector.extract_strided_slice %47 {offsets = [0, 1, 0], sizes = [8, 1, 128], strides = [1, 1, 1]} : vector<8x2x128xf32> to vector<8x1x128xf32>
    %57 = vector.shape_cast %56 : vector<8x1x128xf32> to vector<8x128xf32>
    %58 = vector.shape_cast %57 : vector<8x128xf32> to vector<8x1x128xf32>
    %59 = vector.shape_cast %57 : vector<8x128xf32> to vector<1x8x128xf32>
    %60 = vector.broadcast %58 : vector<8x1x128xf32> to vector<8x8x128xf32>
    %61 = vector.broadcast %59 : vector<1x8x128xf32> to vector<8x8x128xf32>
    %62 = arith.subf %60, %61 : vector<8x8x128xf32>
    %63 = arith.mulf %62, %62 : vector<8x8x128xf32>
    %64 = arith.addf %55, %63 : vector<8x8x128xf32>
    %65 = math.sqrt %64 : vector<8x8x128xf32>
    %cst_4 = arith.constant -5.000000e-01 : f32
    %66 = vector.broadcast %cst_4 : f32 to vector<8x8x128xf32>
    %67 = arith.mulf %66, %65 : vector<8x8x128xf32>
    %68 = math.exp %67 : vector<8x8x128xf32>
    %cst_5 = arith.constant 1.000000e+00 : f32
    %69 = vector.broadcast %cst_5 : f32 to vector<8x8x128xf32>
    %70 = arith.mulf %69, %68 : vector<8x8x128xf32>
    %71 = arith.addf %70, %10 : vector<8x8x128xf32>
    %72 = vector.extract_strided_slice %71 {offsets = [0, 0, 0], sizes = [1, 1, 128], strides = [1, 1, 1]} : vector<8x8x128xf32> to vector<1x1x128xf32>
    %73 = tpu.reciprocal %72 : vector<1x1x128xf32> -> vector<1x1x128xf32>
    %74 = vector.extract_strided_slice %6 {offsets = [0, 0, 0], sizes = [1, 8, 128], strides = [1, 1, 1]} : vector<8x8x128xf32> to vector<1x8x128xf32>
    %75 = vector.broadcast %73 : vector<1x1x128xf32> to vector<1x8x128xf32>
    %76 = arith.mulf %74, %75 : vector<1x8x128xf32>
    %77 = vector.extract_strided_slice %71 {offsets = [0, 0, 0], sizes = [8, 1, 128], strides = [1, 1, 1]} : vector<8x8x128xf32> to vector<8x1x128xf32>
    %78 = vector.broadcast %15 : vector<8x1x1xf32> to vector<8x1x128xf32>
    %79 = arith.subf %77, %78 : vector<8x1x128xf32>
    %80 = vector.broadcast %79 : vector<8x1x128xf32> to vector<8x8x128xf32>
    %81 = vector.broadcast %76 : vector<1x8x128xf32> to vector<8x8x128xf32>
    %82 = arith.mulf %80, %81 : vector<8x8x128xf32>
    %83 = arith.subf %6, %82 : vector<8x8x128xf32>
    %84 = vector.extract_strided_slice %71 {offsets = [0, 0, 0], sizes = [1, 8, 128], strides = [1, 1, 1]} : vector<8x8x128xf32> to vector<1x8x128xf32>
    %85 = vector.broadcast %73 : vector<1x1x128xf32> to vector<1x8x128xf32>
    %86 = arith.mulf %84, %85 : vector<1x8x128xf32>
    %87 = vector.broadcast %79 : vector<8x1x128xf32> to vector<8x8x128xf32>
    %88 = vector.broadcast %86 : vector<1x8x128xf32> to vector<8x8x128xf32>
    %89 = arith.mulf %87, %88 : vector<8x8x128xf32>
    %90 = arith.subf %71, %89 : vector<8x8x128xf32>
    %91 = vector.extract_strided_slice %90 {offsets = [1, 1, 0], sizes = [1, 1, 128], strides = [1, 1, 1]} : vector<8x8x128xf32> to vector<1x1x128xf32>
    %92 = tpu.reciprocal %91 : vector<1x1x128xf32> -> vector<1x1x128xf32>
    %93 = vector.extract_strided_slice %83 {offsets = [1, 0, 0], sizes = [1, 8, 128], strides = [1, 1, 1]} : vector<8x8x128xf32> to vector<1x8x128xf32>
    %94 = vector.broadcast %92 : vector<1x1x128xf32> to vector<1x8x128xf32>
    %95 = arith.mulf %93, %94 : vector<1x8x128xf32>
    %96 = vector.extract_strided_slice %90 {offsets = [0, 1, 0], sizes = [8, 1, 128], strides = [1, 1, 1]} : vector<8x8x128xf32> to vector<8x1x128xf32>
    %97 = vector.broadcast %19 : vector<8x1x1xf32> to vector<8x1x128xf32>
    %98 = arith.subf %96, %97 : vector<8x1x128xf32>
    %99 = vector.broadcast %98 : vector<8x1x128xf32> to vector<8x8x128xf32>
    %100 = vector.broadcast %95 : vector<1x8x128xf32> to vector<8x8x128xf32>
    %101 = arith.mulf %99, %100 : vector<8x8x128xf32>
    %102 = arith.subf %83, %101 : vector<8x8x128xf32>
    %103 = vector.extract_strided_slice %90 {offsets = [1, 0, 0], sizes = [1, 8, 128], strides = [1, 1, 1]} : vector<8x8x128xf32> to vector<1x8x128xf32>
    %104 = vector.broadcast %92 : vector<1x1x128xf32> to vector<1x8x128xf32>
    %105 = arith.mulf %103, %104 : vector<1x8x128xf32>
    %106 = vector.broadcast %98 : vector<8x1x128xf32> to vector<8x8x128xf32>
    %107 = vector.broadcast %105 : vector<1x8x128xf32> to vector<8x8x128xf32>
    %108 = arith.mulf %106, %107 : vector<8x8x128xf32>
    %109 = arith.subf %90, %108 : vector<8x8x128xf32>
    %110 = vector.extract_strided_slice %109 {offsets = [2, 2, 0], sizes = [1, 1, 128], strides = [1, 1, 1]} : vector<8x8x128xf32> to vector<1x1x128xf32>
    %111 = tpu.reciprocal %110 : vector<1x1x128xf32> -> vector<1x1x128xf32>
    %112 = vector.extract_strided_slice %102 {offsets = [2, 0, 0], sizes = [1, 8, 128], strides = [1, 1, 1]} : vector<8x8x128xf32> to vector<1x8x128xf32>
    %113 = vector.broadcast %111 : vector<1x1x128xf32> to vector<1x8x128xf32>
    %114 = arith.mulf %112, %113 : vector<1x8x128xf32>
    %115 = vector.extract_strided_slice %109 {offsets = [0, 2, 0], sizes = [8, 1, 128], strides = [1, 1, 1]} : vector<8x8x128xf32> to vector<8x1x128xf32>
    %116 = vector.broadcast %23 : vector<8x1x1xf32> to vector<8x1x128xf32>
    %117 = arith.subf %115, %116 : vector<8x1x128xf32>
    %118 = vector.broadcast %117 : vector<8x1x128xf32> to vector<8x8x128xf32>
    %119 = vector.broadcast %114 : vector<1x8x128xf32> to vector<8x8x128xf32>
    %120 = arith.mulf %118, %119 : vector<8x8x128xf32>
    %121 = arith.subf %102, %120 : vector<8x8x128xf32>
    %122 = vector.extract_strided_slice %109 {offsets = [2, 0, 0], sizes = [1, 8, 128], strides = [1, 1, 1]} : vector<8x8x128xf32> to vector<1x8x128xf32>
    %123 = vector.broadcast %111 : vector<1x1x128xf32> to vector<1x8x128xf32>
    %124 = arith.mulf %122, %123 : vector<1x8x128xf32>
    %125 = vector.broadcast %117 : vector<8x1x128xf32> to vector<8x8x128xf32>
    %126 = vector.broadcast %124 : vector<1x8x128xf32> to vector<8x8x128xf32>
    %127 = arith.mulf %125, %126 : vector<8x8x128xf32>
    %128 = arith.subf %109, %127 : vector<8x8x128xf32>
    %129 = vector.extract_strided_slice %128 {offsets = [3, 3, 0], sizes = [1, 1, 128], strides = [1, 1, 1]} : vector<8x8x128xf32> to vector<1x1x128xf32>
    %130 = tpu.reciprocal %129 : vector<1x1x128xf32> -> vector<1x1x128xf32>
    %131 = vector.extract_strided_slice %121 {offsets = [3, 0, 0], sizes = [1, 8, 128], strides = [1, 1, 1]} : vector<8x8x128xf32> to vector<1x8x128xf32>
    %132 = vector.broadcast %130 : vector<1x1x128xf32> to vector<1x8x128xf32>
    %133 = arith.mulf %131, %132 : vector<1x8x128xf32>
    %134 = vector.extract_strided_slice %128 {offsets = [0, 3, 0], sizes = [8, 1, 128], strides = [1, 1, 1]} : vector<8x8x128xf32> to vector<8x1x128xf32>
    %135 = vector.broadcast %27 : vector<8x1x1xf32> to vector<8x1x128xf32>
    %136 = arith.subf %134, %135 : vector<8x1x128xf32>
    %137 = vector.broadcast %136 : vector<8x1x128xf32> to vector<8x8x128xf32>
    %138 = vector.broadcast %133 : vector<1x8x128xf32> to vector<8x8x128xf32>
    %139 = arith.mulf %137, %138 : vector<8x8x128xf32>
    %140 = arith.subf %121, %139 : vector<8x8x128xf32>
    %141 = vector.extract_strided_slice %128 {offsets = [3, 0, 0], sizes = [1, 8, 128], strides = [1, 1, 1]} : vector<8x8x128xf32> to vector<1x8x128xf32>
    %142 = vector.broadcast %130 : vector<1x1x128xf32> to vector<1x8x128xf32>
    %143 = arith.mulf %141, %142 : vector<1x8x128xf32>
    %144 = vector.broadcast %136 : vector<8x1x128xf32> to vector<8x8x128xf32>
    %145 = vector.broadcast %143 : vector<1x8x128xf32> to vector<8x8x128xf32>
    %146 = arith.mulf %144, %145 : vector<8x8x128xf32>
    %147 = arith.subf %128, %146 : vector<8x8x128xf32>
    %148 = vector.extract_strided_slice %147 {offsets = [4, 4, 0], sizes = [1, 1, 128], strides = [1, 1, 1]} : vector<8x8x128xf32> to vector<1x1x128xf32>
    %149 = tpu.reciprocal %148 : vector<1x1x128xf32> -> vector<1x1x128xf32>
    %150 = vector.extract_strided_slice %140 {offsets = [4, 0, 0], sizes = [1, 8, 128], strides = [1, 1, 1]} : vector<8x8x128xf32> to vector<1x8x128xf32>
    %151 = vector.broadcast %149 : vector<1x1x128xf32> to vector<1x8x128xf32>
    %152 = arith.mulf %150, %151 : vector<1x8x128xf32>
    %153 = vector.extract_strided_slice %147 {offsets = [0, 4, 0], sizes = [8, 1, 128], strides = [1, 1, 1]} : vector<8x8x128xf32> to vector<8x1x128xf32>
    %154 = vector.broadcast %31 : vector<8x1x1xf32> to vector<8x1x128xf32>
    %155 = arith.subf %153, %154 : vector<8x1x128xf32>
    %156 = vector.broadcast %155 : vector<8x1x128xf32> to vector<8x8x128xf32>
    %157 = vector.broadcast %152 : vector<1x8x128xf32> to vector<8x8x128xf32>
    %158 = arith.mulf %156, %157 : vector<8x8x128xf32>
    %159 = arith.subf %140, %158 : vector<8x8x128xf32>
    %160 = vector.extract_strided_slice %147 {offsets = [4, 0, 0], sizes = [1, 8, 128], strides = [1, 1, 1]} : vector<8x8x128xf32> to vector<1x8x128xf32>
    %161 = vector.broadcast %149 : vector<1x1x128xf32> to vector<1x8x128xf32>
    %162 = arith.mulf %160, %161 : vector<1x8x128xf32>
    %163 = vector.broadcast %155 : vector<8x1x128xf32> to vector<8x8x128xf32>
    %164 = vector.broadcast %162 : vector<1x8x128xf32> to vector<8x8x128xf32>
    %165 = arith.mulf %163, %164 : vector<8x8x128xf32>
    %166 = arith.subf %147, %165 : vector<8x8x128xf32>
    %167 = vector.extract_strided_slice %166 {offsets = [5, 5, 0], sizes = [1, 1, 128], strides = [1, 1, 1]} : vector<8x8x128xf32> to vector<1x1x128xf32>
    %168 = tpu.reciprocal %167 : vector<1x1x128xf32> -> vector<1x1x128xf32>
    %169 = vector.extract_strided_slice %159 {offsets = [5, 0, 0], sizes = [1, 8, 128], strides = [1, 1, 1]} : vector<8x8x128xf32> to vector<1x8x128xf32>
    %170 = vector.broadcast %168 : vector<1x1x128xf32> to vector<1x8x128xf32>
    %171 = arith.mulf %169, %170 : vector<1x8x128xf32>
    %172 = vector.extract_strided_slice %166 {offsets = [0, 5, 0], sizes = [8, 1, 128], strides = [1, 1, 1]} : vector<8x8x128xf32> to vector<8x1x128xf32>
    %173 = vector.broadcast %35 : vector<8x1x1xf32> to vector<8x1x128xf32>
    %174 = arith.subf %172, %173 : vector<8x1x128xf32>
    %175 = vector.broadcast %174 : vector<8x1x128xf32> to vector<8x8x128xf32>
    %176 = vector.broadcast %171 : vector<1x8x128xf32> to vector<8x8x128xf32>
    %177 = arith.mulf %175, %176 : vector<8x8x128xf32>
    %178 = arith.subf %159, %177 : vector<8x8x128xf32>
    %179 = vector.extract_strided_slice %166 {offsets = [5, 0, 0], sizes = [1, 8, 128], strides = [1, 1, 1]} : vector<8x8x128xf32> to vector<1x8x128xf32>
    %180 = vector.broadcast %168 : vector<1x1x128xf32> to vector<1x8x128xf32>
    %181 = arith.mulf %179, %180 : vector<1x8x128xf32>
    %182 = vector.broadcast %174 : vector<8x1x128xf32> to vector<8x8x128xf32>
    %183 = vector.broadcast %181 : vector<1x8x128xf32> to vector<8x8x128xf32>
    %184 = arith.mulf %182, %183 : vector<8x8x128xf32>
    %185 = arith.subf %166, %184 : vector<8x8x128xf32>
    %186 = vector.extract_strided_slice %185 {offsets = [6, 6, 0], sizes = [1, 1, 128], strides = [1, 1, 1]} : vector<8x8x128xf32> to vector<1x1x128xf32>
    %187 = tpu.reciprocal %186 : vector<1x1x128xf32> -> vector<1x1x128xf32>
    %188 = vector.extract_strided_slice %178 {offsets = [6, 0, 0], sizes = [1, 8, 128], strides = [1, 1, 1]} : vector<8x8x128xf32> to vector<1x8x128xf32>
    %189 = vector.broadcast %187 : vector<1x1x128xf32> to vector<1x8x128xf32>
    %190 = arith.mulf %188, %189 : vector<1x8x128xf32>
    %191 = vector.extract_strided_slice %185 {offsets = [0, 6, 0], sizes = [8, 1, 128], strides = [1, 1, 1]} : vector<8x8x128xf32> to vector<8x1x128xf32>
    %192 = vector.broadcast %39 : vector<8x1x1xf32> to vector<8x1x128xf32>
    %193 = arith.subf %191, %192 : vector<8x1x128xf32>
    %194 = vector.broadcast %193 : vector<8x1x128xf32> to vector<8x8x128xf32>
    %195 = vector.broadcast %190 : vector<1x8x128xf32> to vector<8x8x128xf32>
    %196 = arith.mulf %194, %195 : vector<8x8x128xf32>
    %197 = arith.subf %178, %196 : vector<8x8x128xf32>
    %198 = vector.extract_strided_slice %185 {offsets = [6, 0, 0], sizes = [1, 8, 128], strides = [1, 1, 1]} : vector<8x8x128xf32> to vector<1x8x128xf32>
    %199 = vector.broadcast %187 : vector<1x1x128xf32> to vector<1x8x128xf32>
    %200 = arith.mulf %198, %199 : vector<1x8x128xf32>
    %201 = vector.broadcast %193 : vector<8x1x128xf32> to vector<8x8x128xf32>
    %202 = vector.broadcast %200 : vector<1x8x128xf32> to vector<8x8x128xf32>
    %203 = arith.mulf %201, %202 : vector<8x8x128xf32>
    %204 = arith.subf %185, %203 : vector<8x8x128xf32>
    %205 = vector.extract_strided_slice %204 {offsets = [7, 7, 0], sizes = [1, 1, 128], strides = [1, 1, 1]} : vector<8x8x128xf32> to vector<1x1x128xf32>
    %206 = tpu.reciprocal %205 : vector<1x1x128xf32> -> vector<1x1x128xf32>
    %207 = vector.extract_strided_slice %197 {offsets = [7, 0, 0], sizes = [1, 8, 128], strides = [1, 1, 1]} : vector<8x8x128xf32> to vector<1x8x128xf32>
    %208 = vector.broadcast %206 : vector<1x1x128xf32> to vector<1x8x128xf32>
    %209 = arith.mulf %207, %208 : vector<1x8x128xf32>
    %210 = vector.extract_strided_slice %204 {offsets = [0, 7, 0], sizes = [8, 1, 128], strides = [1, 1, 1]} : vector<8x8x128xf32> to vector<8x1x128xf32>
    %211 = vector.broadcast %43 : vector<8x1x1xf32> to vector<8x1x128xf32>
    %212 = arith.subf %210, %211 : vector<8x1x128xf32>
    %213 = vector.broadcast %212 : vector<8x1x128xf32> to vector<8x8x128xf32>
    %214 = vector.broadcast %209 : vector<1x8x128xf32> to vector<8x8x128xf32>
    %215 = arith.mulf %213, %214 : vector<8x8x128xf32>
    %216 = arith.subf %197, %215 : vector<8x8x128xf32>
    %c1_i32_6 = arith.constant 1 : i32
    %217 = arith.addi %44, %c1_i32_6 : i32
    %218 = arith.index_cast %217 : i32 to index
    %c0_7 = arith.constant 0 : index
    %c0_8 = arith.constant 0 : index
    %c0_9 = arith.constant 0 : index
    %219 = vector.load %arg1[%218, %c0_7, %c0_8, %c0_9] : memref<2x8x2x128xf32, #tpu.memory_space<vmem>>, vector<1x8x2x128xf32>
    %220 = vector.shape_cast %219 : vector<1x8x2x128xf32> to vector<8x2x128xf32>
    %221 = vector.extract_strided_slice %220 {offsets = [0, 0, 0], sizes = [8, 1, 128], strides = [1, 1, 1]} : vector<8x2x128xf32> to vector<8x1x128xf32>
    %222 = vector.shape_cast %221 : vector<8x1x128xf32> to vector<8x128xf32>
    %223 = vector.shape_cast %222 : vector<8x128xf32> to vector<8x1x128xf32>
    %224 = vector.shape_cast %222 : vector<8x128xf32> to vector<1x8x128xf32>
    %225 = vector.broadcast %223 : vector<8x1x128xf32> to vector<8x8x128xf32>
    %226 = vector.broadcast %224 : vector<1x8x128xf32> to vector<8x8x128xf32>
    %227 = arith.subf %225, %226 : vector<8x8x128xf32>
    %228 = arith.mulf %227, %227 : vector<8x8x128xf32>
    %229 = vector.extract_strided_slice %220 {offsets = [0, 1, 0], sizes = [8, 1, 128], strides = [1, 1, 1]} : vector<8x2x128xf32> to vector<8x1x128xf32>
    %230 = vector.shape_cast %229 : vector<8x1x128xf32> to vector<8x128xf32>
    %231 = vector.shape_cast %230 : vector<8x128xf32> to vector<8x1x128xf32>
    %232 = vector.shape_cast %230 : vector<8x128xf32> to vector<1x8x128xf32>
    %233 = vector.broadcast %231 : vector<8x1x128xf32> to vector<8x8x128xf32>
    %234 = vector.broadcast %232 : vector<1x8x128xf32> to vector<8x8x128xf32>
    %235 = arith.subf %233, %234 : vector<8x8x128xf32>
    %236 = arith.mulf %235, %235 : vector<8x8x128xf32>
    %237 = arith.addf %228, %236 : vector<8x8x128xf32>
    %238 = math.sqrt %237 : vector<8x8x128xf32>
    %cst_10 = arith.constant -5.000000e-01 : f32
    %239 = vector.broadcast %cst_10 : f32 to vector<8x8x128xf32>
    %240 = arith.mulf %239, %238 : vector<8x8x128xf32>
    %241 = math.exp %240 : vector<8x8x128xf32>
    %cst_11 = arith.constant 1.000000e+00 : f32
    %242 = vector.broadcast %cst_11 : f32 to vector<8x8x128xf32>
    %243 = arith.mulf %242, %241 : vector<8x8x128xf32>
    %244 = arith.addf %243, %10 : vector<8x8x128xf32>
    %245 = vector.extract_strided_slice %244 {offsets = [0, 0, 0], sizes = [1, 1, 128], strides = [1, 1, 1]} : vector<8x8x128xf32> to vector<1x1x128xf32>
    %246 = tpu.reciprocal %245 : vector<1x1x128xf32> -> vector<1x1x128xf32>
    %247 = vector.extract_strided_slice %6 {offsets = [0, 0, 0], sizes = [1, 8, 128], strides = [1, 1, 1]} : vector<8x8x128xf32> to vector<1x8x128xf32>
    %248 = vector.broadcast %246 : vector<1x1x128xf32> to vector<1x8x128xf32>
    %249 = arith.mulf %247, %248 : vector<1x8x128xf32>
    %250 = vector.extract_strided_slice %244 {offsets = [0, 0, 0], sizes = [8, 1, 128], strides = [1, 1, 1]} : vector<8x8x128xf32> to vector<8x1x128xf32>
    %251 = vector.broadcast %15 : vector<8x1x1xf32> to vector<8x1x128xf32>
    %252 = arith.subf %250, %251 : vector<8x1x128xf32>
    %253 = vector.broadcast %252 : vector<8x1x128xf32> to vector<8x8x128xf32>
    %254 = vector.broadcast %249 : vector<1x8x128xf32> to vector<8x8x128xf32>
    %255 = arith.mulf %253, %254 : vector<8x8x128xf32>
    %256 = arith.subf %6, %255 : vector<8x8x128xf32>
    %257 = vector.extract_strided_slice %244 {offsets = [0, 0, 0], sizes = [1, 8, 128], strides = [1, 1, 1]} : vector<8x8x128xf32> to vector<1x8x128xf32>
    %258 = vector.broadcast %246 : vector<1x1x128xf32> to vector<1x8x128xf32>
    %259 = arith.mulf %257, %258 : vector<1x8x128xf32>
    %260 = vector.broadcast %252 : vector<8x1x128xf32> to vector<8x8x128xf32>
    %261 = vector.broadcast %259 : vector<1x8x128xf32> to vector<8x8x128xf32>
    %262 = arith.mulf %260, %261 : vector<8x8x128xf32>
    %263 = arith.subf %244, %262 : vector<8x8x128xf32>
    %264 = vector.extract_strided_slice %263 {offsets = [1, 1, 0], sizes = [1, 1, 128], strides = [1, 1, 1]} : vector<8x8x128xf32> to vector<1x1x128xf32>
    %265 = tpu.reciprocal %264 : vector<1x1x128xf32> -> vector<1x1x128xf32>
    %266 = vector.extract_strided_slice %256 {offsets = [1, 0, 0], sizes = [1, 8, 128], strides = [1, 1, 1]} : vector<8x8x128xf32> to vector<1x8x128xf32>
    %267 = vector.broadcast %265 : vector<1x1x128xf32> to vector<1x8x128xf32>
    %268 = arith.mulf %266, %267 : vector<1x8x128xf32>
    %269 = vector.extract_strided_slice %263 {offsets = [0, 1, 0], sizes = [8, 1, 128], strides = [1, 1, 1]} : vector<8x8x128xf32> to vector<8x1x128xf32>
    %270 = vector.broadcast %19 : vector<8x1x1xf32> to vector<8x1x128xf32>
    %271 = arith.subf %269, %270 : vector<8x1x128xf32>
    %272 = vector.broadcast %271 : vector<8x1x128xf32> to vector<8x8x128xf32>
    %273 = vector.broadcast %268 : vector<1x8x128xf32> to vector<8x8x128xf32>
    %274 = arith.mulf %272, %273 : vector<8x8x128xf32>
    %275 = arith.subf %256, %274 : vector<8x8x128xf32>
    %276 = vector.extract_strided_slice %263 {offsets = [1, 0, 0], sizes = [1, 8, 128], strides = [1, 1, 1]} : vector<8x8x128xf32> to vector<1x8x128xf32>
    %277 = vector.broadcast %265 : vector<1x1x128xf32> to vector<1x8x128xf32>
    %278 = arith.mulf %276, %277 : vector<1x8x128xf32>
    %279 = vector.broadcast %271 : vector<8x1x128xf32> to vector<8x8x128xf32>
    %280 = vector.broadcast %278 : vector<1x8x128xf32> to vector<8x8x128xf32>
    %281 = arith.mulf %279, %280 : vector<8x8x128xf32>
    %282 = arith.subf %263, %281 : vector<8x8x128xf32>
    %283 = vector.extract_strided_slice %282 {offsets = [2, 2, 0], sizes = [1, 1, 128], strides = [1, 1, 1]} : vector<8x8x128xf32> to vector<1x1x128xf32>
    %284 = tpu.reciprocal %283 : vector<1x1x128xf32> -> vector<1x1x128xf32>
    %285 = vector.extract_strided_slice %275 {offsets = [2, 0, 0], sizes = [1, 8, 128], strides = [1, 1, 1]} : vector<8x8x128xf32> to vector<1x8x128xf32>
    %286 = vector.broadcast %284 : vector<1x1x128xf32> to vector<1x8x128xf32>
    %287 = arith.mulf %285, %286 : vector<1x8x128xf32>
    %288 = vector.extract_strided_slice %282 {offsets = [0, 2, 0], sizes = [8, 1, 128], strides = [1, 1, 1]} : vector<8x8x128xf32> to vector<8x1x128xf32>
    %289 = vector.broadcast %23 : vector<8x1x1xf32> to vector<8x1x128xf32>
    %290 = arith.subf %288, %289 : vector<8x1x128xf32>
    %291 = vector.broadcast %290 : vector<8x1x128xf32> to vector<8x8x128xf32>
    %292 = vector.broadcast %287 : vector<1x8x128xf32> to vector<8x8x128xf32>
    %293 = arith.mulf %291, %292 : vector<8x8x128xf32>
    %294 = arith.subf %275, %293 : vector<8x8x128xf32>
    %295 = vector.extract_strided_slice %282 {offsets = [2, 0, 0], sizes = [1, 8, 128], strides = [1, 1, 1]} : vector<8x8x128xf32> to vector<1x8x128xf32>
    %296 = vector.broadcast %284 : vector<1x1x128xf32> to vector<1x8x128xf32>
    %297 = arith.mulf %295, %296 : vector<1x8x128xf32>
    %298 = vector.broadcast %290 : vector<8x1x128xf32> to vector<8x8x128xf32>
    %299 = vector.broadcast %297 : vector<1x8x128xf32> to vector<8x8x128xf32>
    %300 = arith.mulf %298, %299 : vector<8x8x128xf32>
    %301 = arith.subf %282, %300 : vector<8x8x128xf32>
    %302 = vector.extract_strided_slice %301 {offsets = [3, 3, 0], sizes = [1, 1, 128], strides = [1, 1, 1]} : vector<8x8x128xf32> to vector<1x1x128xf32>
    %303 = tpu.reciprocal %302 : vector<1x1x128xf32> -> vector<1x1x128xf32>
    %304 = vector.extract_strided_slice %294 {offsets = [3, 0, 0], sizes = [1, 8, 128], strides = [1, 1, 1]} : vector<8x8x128xf32> to vector<1x8x128xf32>
    %305 = vector.broadcast %303 : vector<1x1x128xf32> to vector<1x8x128xf32>
    %306 = arith.mulf %304, %305 : vector<1x8x128xf32>
    %307 = vector.extract_strided_slice %301 {offsets = [0, 3, 0], sizes = [8, 1, 128], strides = [1, 1, 1]} : vector<8x8x128xf32> to vector<8x1x128xf32>
    %308 = vector.broadcast %27 : vector<8x1x1xf32> to vector<8x1x128xf32>
    %309 = arith.subf %307, %308 : vector<8x1x128xf32>
    %310 = vector.broadcast %309 : vector<8x1x128xf32> to vector<8x8x128xf32>
    %311 = vector.broadcast %306 : vector<1x8x128xf32> to vector<8x8x128xf32>
    %312 = arith.mulf %310, %311 : vector<8x8x128xf32>
    %313 = arith.subf %294, %312 : vector<8x8x128xf32>
    %314 = vector.extract_strided_slice %301 {offsets = [3, 0, 0], sizes = [1, 8, 128], strides = [1, 1, 1]} : vector<8x8x128xf32> to vector<1x8x128xf32>
    %315 = vector.broadcast %303 : vector<1x1x128xf32> to vector<1x8x128xf32>
    %316 = arith.mulf %314, %315 : vector<1x8x128xf32>
    %317 = vector.broadcast %309 : vector<8x1x128xf32> to vector<8x8x128xf32>
    %318 = vector.broadcast %316 : vector<1x8x128xf32> to vector<8x8x128xf32>
    %319 = arith.mulf %317, %318 : vector<8x8x128xf32>
    %320 = arith.subf %301, %319 : vector<8x8x128xf32>
    %321 = vector.extract_strided_slice %320 {offsets = [4, 4, 0], sizes = [1, 1, 128], strides = [1, 1, 1]} : vector<8x8x128xf32> to vector<1x1x128xf32>
    %322 = tpu.reciprocal %321 : vector<1x1x128xf32> -> vector<1x1x128xf32>
    %323 = vector.extract_strided_slice %313 {offsets = [4, 0, 0], sizes = [1, 8, 128], strides = [1, 1, 1]} : vector<8x8x128xf32> to vector<1x8x128xf32>
    %324 = vector.broadcast %322 : vector<1x1x128xf32> to vector<1x8x128xf32>
    %325 = arith.mulf %323, %324 : vector<1x8x128xf32>
    %326 = vector.extract_strided_slice %320 {offsets = [0, 4, 0], sizes = [8, 1, 128], strides = [1, 1, 1]} : vector<8x8x128xf32> to vector<8x1x128xf32>
    %327 = vector.broadcast %31 : vector<8x1x1xf32> to vector<8x1x128xf32>
    %328 = arith.subf %326, %327 : vector<8x1x128xf32>
    %329 = vector.broadcast %328 : vector<8x1x128xf32> to vector<8x8x128xf32>
    %330 = vector.broadcast %325 : vector<1x8x128xf32> to vector<8x8x128xf32>
    %331 = arith.mulf %329, %330 : vector<8x8x128xf32>
    %332 = arith.subf %313, %331 : vector<8x8x128xf32>
    %333 = vector.extract_strided_slice %320 {offsets = [4, 0, 0], sizes = [1, 8, 128], strides = [1, 1, 1]} : vector<8x8x128xf32> to vector<1x8x128xf32>
    %334 = vector.broadcast %322 : vector<1x1x128xf32> to vector<1x8x128xf32>
    %335 = arith.mulf %333, %334 : vector<1x8x128xf32>
    %336 = vector.broadcast %328 : vector<8x1x128xf32> to vector<8x8x128xf32>
    %337 = vector.broadcast %335 : vector<1x8x128xf32> to vector<8x8x128xf32>
    %338 = arith.mulf %336, %337 : vector<8x8x128xf32>
    %339 = arith.subf %320, %338 : vector<8x8x128xf32>
    %340 = vector.extract_strided_slice %339 {offsets = [5, 5, 0], sizes = [1, 1, 128], strides = [1, 1, 1]} : vector<8x8x128xf32> to vector<1x1x128xf32>
    %341 = tpu.reciprocal %340 : vector<1x1x128xf32> -> vector<1x1x128xf32>
    %342 = vector.extract_strided_slice %332 {offsets = [5, 0, 0], sizes = [1, 8, 128], strides = [1, 1, 1]} : vector<8x8x128xf32> to vector<1x8x128xf32>
    %343 = vector.broadcast %341 : vector<1x1x128xf32> to vector<1x8x128xf32>
    %344 = arith.mulf %342, %343 : vector<1x8x128xf32>
    %345 = vector.extract_strided_slice %339 {offsets = [0, 5, 0], sizes = [8, 1, 128], strides = [1, 1, 1]} : vector<8x8x128xf32> to vector<8x1x128xf32>
    %346 = vector.broadcast %35 : vector<8x1x1xf32> to vector<8x1x128xf32>
    %347 = arith.subf %345, %346 : vector<8x1x128xf32>
    %348 = vector.broadcast %347 : vector<8x1x128xf32> to vector<8x8x128xf32>
    %349 = vector.broadcast %344 : vector<1x8x128xf32> to vector<8x8x128xf32>
    %350 = arith.mulf %348, %349 : vector<8x8x128xf32>
    %351 = arith.subf %332, %350 : vector<8x8x128xf32>
    %352 = vector.extract_strided_slice %339 {offsets = [5, 0, 0], sizes = [1, 8, 128], strides = [1, 1, 1]} : vector<8x8x128xf32> to vector<1x8x128xf32>
    %353 = vector.broadcast %341 : vector<1x1x128xf32> to vector<1x8x128xf32>
    %354 = arith.mulf %352, %353 : vector<1x8x128xf32>
    %355 = vector.broadcast %347 : vector<8x1x128xf32> to vector<8x8x128xf32>
    %356 = vector.broadcast %354 : vector<1x8x128xf32> to vector<8x8x128xf32>
    %357 = arith.mulf %355, %356 : vector<8x8x128xf32>
    %358 = arith.subf %339, %357 : vector<8x8x128xf32>
    %359 = vector.extract_strided_slice %358 {offsets = [6, 6, 0], sizes = [1, 1, 128], strides = [1, 1, 1]} : vector<8x8x128xf32> to vector<1x1x128xf32>
    %360 = tpu.reciprocal %359 : vector<1x1x128xf32> -> vector<1x1x128xf32>
    %361 = vector.extract_strided_slice %351 {offsets = [6, 0, 0], sizes = [1, 8, 128], strides = [1, 1, 1]} : vector<8x8x128xf32> to vector<1x8x128xf32>
    %362 = vector.broadcast %360 : vector<1x1x128xf32> to vector<1x8x128xf32>
    %363 = arith.mulf %361, %362 : vector<1x8x128xf32>
    %364 = vector.extract_strided_slice %358 {offsets = [0, 6, 0], sizes = [8, 1, 128], strides = [1, 1, 1]} : vector<8x8x128xf32> to vector<8x1x128xf32>
    %365 = vector.broadcast %39 : vector<8x1x1xf32> to vector<8x1x128xf32>
    %366 = arith.subf %364, %365 : vector<8x1x128xf32>
    %367 = vector.broadcast %366 : vector<8x1x128xf32> to vector<8x8x128xf32>
    %368 = vector.broadcast %363 : vector<1x8x128xf32> to vector<8x8x128xf32>
    %369 = arith.mulf %367, %368 : vector<8x8x128xf32>
    %370 = arith.subf %351, %369 : vector<8x8x128xf32>
    %371 = vector.extract_strided_slice %358 {offsets = [6, 0, 0], sizes = [1, 8, 128], strides = [1, 1, 1]} : vector<8x8x128xf32> to vector<1x8x128xf32>
    %372 = vector.broadcast %360 : vector<1x1x128xf32> to vector<1x8x128xf32>
    %373 = arith.mulf %371, %372 : vector<1x8x128xf32>
    %374 = vector.broadcast %366 : vector<8x1x128xf32> to vector<8x8x128xf32>
    %375 = vector.broadcast %373 : vector<1x8x128xf32> to vector<8x8x128xf32>
    %376 = arith.mulf %374, %375 : vector<8x8x128xf32>
    %377 = arith.subf %358, %376 : vector<8x8x128xf32>
    %378 = vector.extract_strided_slice %377 {offsets = [7, 7, 0], sizes = [1, 1, 128], strides = [1, 1, 1]} : vector<8x8x128xf32> to vector<1x1x128xf32>
    %379 = tpu.reciprocal %378 : vector<1x1x128xf32> -> vector<1x1x128xf32>
    %380 = vector.extract_strided_slice %370 {offsets = [7, 0, 0], sizes = [1, 8, 128], strides = [1, 1, 1]} : vector<8x8x128xf32> to vector<1x8x128xf32>
    %381 = vector.broadcast %379 : vector<1x1x128xf32> to vector<1x8x128xf32>
    %382 = arith.mulf %380, %381 : vector<1x8x128xf32>
    %383 = vector.extract_strided_slice %377 {offsets = [0, 7, 0], sizes = [8, 1, 128], strides = [1, 1, 1]} : vector<8x8x128xf32> to vector<8x1x128xf32>
    %384 = vector.broadcast %43 : vector<8x1x1xf32> to vector<8x1x128xf32>
    %385 = arith.subf %383, %384 : vector<8x1x128xf32>
    %386 = vector.broadcast %385 : vector<8x1x128xf32> to vector<8x8x128xf32>
    %387 = vector.broadcast %382 : vector<1x8x128xf32> to vector<8x8x128xf32>
    %388 = arith.mulf %386, %387 : vector<8x8x128xf32>
    %389 = arith.subf %370, %388 : vector<8x8x128xf32>
    %390 = arith.index_cast %44 : i32 to index
    %c0_12 = arith.constant 0 : index
    %c0_13 = arith.constant 0 : index
    %c0_14 = arith.constant 0 : index
    %391 = vector.load %arg2[%390, %c0_12, %c0_13, %c0_14] : memref<2x8x8x128xf32, #tpu.memory_space<vmem>>, vector<1x8x8x128xf32>
    %392 = vector.shape_cast %391 : vector<1x8x8x128xf32> to vector<8x8x128xf32>
    %393 = vector.shape_cast %216 : vector<8x8x128xf32> to vector<1x8x8x128xf32>
    tpu.vector_store %arg2[%390, %c0_12, %c0_13, %c0_14], %393 {strides = array<i32>} : memref<2x8x8x128xf32, #tpu.memory_space<vmem>>, vector<1x8x8x128xf32>,
    %c1_i32_15 = arith.constant 1 : i32
    %394 = arith.addi %44, %c1_i32_15 : i32
    %395 = arith.index_cast %394 : i32 to index
    %c0_16 = arith.constant 0 : index
    %c0_17 = arith.constant 0 : index
    %c0_18 = arith.constant 0 : index
    %396 = vector.load %arg2[%395, %c0_16, %c0_17, %c0_18] : memref<2x8x8x128xf32, #tpu.memory_space<vmem>>, vector<1x8x8x128xf32>
    %397 = vector.shape_cast %396 : vector<1x8x8x128xf32> to vector<8x8x128xf32>
    %398 = vector.shape_cast %389 : vector<8x8x128xf32> to vector<1x8x8x128xf32>
    tpu.vector_store %arg2[%395, %c0_16, %c0_17, %c0_18], %398 {strides = array<i32>} : memref<2x8x8x128xf32, #tpu.memory_space<vmem>>, vector<1x8x8x128xf32>,
    %c1_i32_19 = arith.constant 1 : i32
    return
  }
  func.func @transform_0(%arg0: i32) -> (i32, i32, i32, i32) {
    %c0_i32 = arith.constant 0 : i32
    %c0_i32_0 = arith.constant 0 : i32
    %c0_i32_1 = arith.constant 0 : i32
    %c0_i32_2 = arith.constant 0 : i32
    return %arg0, %c0_i32, %c0_i32_0, %c0_i32_1 : i32, i32, i32, i32
  }
  func.func @transform_1(%arg0: i32) -> (i32, i32, i32, i32) {
    %c0_i32 = arith.constant 0 : i32
    %c0_i32_0 = arith.constant 0 : i32
    %c0_i32_1 = arith.constant 0 : i32
    %c0_i32_2 = arith.constant 0 : i32
    return %arg0, %c0_i32, %c0_i32_0, %c0_i32_1 : i32, i32, i32, i32
  }
}

</mosaic_0001>

<llo_original>
// kernel: tpu_custom_call.1
$region0: #{tpu_custom_call.1}
  #allocation0 [shape = 'u32[]', space=smem, size = 0x4, offset = 0x4, fixed_abs, tag = 'smem constant byte address 0x4 - core index']
  #allocation1 [shape = 'u32[144,128]{1,0:T(1,128)}', space=vmem, size = 0x12000, scoped, tag = 'internal scratch']
  %s0 = inlined_call_operand.hbm [shape: f32[2,8,2,128], index: 0, kind: input, shape index: {}]
  %s1 = inlined_call_operand.hbm [shape: f32[2,8,8,128], index: 1, kind: output, shape index: {}]
  %s2 = sld [smem:[#allocation0]]
  $region18: #{tpu_custom_call.1} parent=0
    _
  %s4 = ssub.s32 1, %s2
  %s5 = scalar_select 0, %s4, %s2
  $region1: #{tpu_custom_call.1} parent=0
    #allocation2 [shape = 'u8[16384]{0}', space=vmem, size = 0x4000, scoped, tag = 'input window, operand 0, single buffered']
    #allocation3 [shape = 's32[1]{0}', space=sflag, size = 0x4, scoped, tag = 'scoped memory for tpu_custom_call.1']
    #allocation4 [shape = 's32[1]{0}', space=sflag, size = 0x4, scoped, tag = 'scoped memory for tpu_custom_call.1']
    #allocation5 [shape = 'u8[65536]{0}', space=vmem, size = 0x10000, scoped, tag = 'output window, operand 0, single buffered']
    %6 = vsyncpa [#allocation3], 0
    %7 = vsyncpa [#allocation4], 0
    // Predicated region
    $region2: #{tpu_custom_call.1} parent=1 // pred_check
      _
    $region3: #{tpu_custom_call.1} parent=1 // pred_check_branch
      %9 = sbr.rel (0) target = $region5
    $region4: #{tpu_custom_call.1} parent=1 // pred_region
      %s11 = ssub.s32 512, 512
      %12 = vsyncadd [#allocation3], %s11
      %s13 = sshll.u32 [#allocation2], 4
      %s14 = int_to_ptr.vmem [resolvable:$true] %s13
      %19 = dma.hbm_to_vmem [thread:$0]  %s0, 512, %s14, [#allocation3], 32, 32, 2
    $region5: #{tpu_custom_call.1} parent=1 // pred_fallthru
      _
    // Predicated region
    $region6: #{tpu_custom_call.1} parent=1 // pred_check
      _
    $region7: #{tpu_custom_call.1} parent=1 // pred_check_branch
      %21 = sbr.rel (0) target = $region9
    $region8: #{tpu_custom_call.1} parent=1 // pred_region
      %22 = dma.done [#allocation3], 512
    $region9: #{tpu_custom_call.1} parent=1 // pred_fallthru
      _
    %v23 = vlaneseq
    %v24 = vshrl.u32 %v23, 7
    %vm25 = vcmp.eq.s32.totalorder %v24, 0
    %vm26 = vcmp.eq.s32.totalorder %v24, 1
    %vm27 = vcmp.eq.s32.totalorder %v24, 2
    %vm28 = vcmp.eq.s32.totalorder %v24, 3
    %vm29 = vcmp.eq.s32.totalorder %v24, 4
    %vm30 = vcmp.eq.s32.totalorder %v24, 5
    %vm31 = vcmp.eq.s32.totalorder %v24, 6
    %vm32 = vcmp.eq.s32.totalorder %v24, 7
    %v33 = vsel %vm25, 1, 0
    %v34 = vsel %vm26, 1, 0
    %v35 = vsel %vm27, 1, 0
    %v36 = vsel %vm28, 1, 0
    %v37 = vsel %vm29, 1, 0
    %v38 = vsel %vm30, 1, 0
    %v39 = vsel %vm31, 1, 0
    %v40 = vsel %vm32, 1, 0
    %v41 = vcvt.s32.f32 %v33
    %v42 = vcvt.s32.f32 %v34
    %v43 = vcvt.s32.f32 %v35
    %v44 = vcvt.s32.f32 %v36
    %v45 = vcvt.s32.f32 %v37
    %v46 = vcvt.s32.f32 %v38
    %v47 = vcvt.s32.f32 %v39
    %v48 = vcvt.s32.f32 %v40
    %v49 = vmul.f32 %v41, 0.1
    %v50 = vmul.f32 %v42, 0.1
    %v51 = vmul.f32 %v43, 0.1
    %v52 = vmul.f32 %v44, 0.1
    %v53 = vmul.f32 %v45, 0.1
    %v54 = vmul.f32 %v46, 0.1
    %v55 = vmul.f32 %v47, 0.1
    %v56 = vmul.f32 %v48, 0.1
    %v57 = vcvt.s32.f32 1
    %v58 = vcvt.s32.f32 0
    %v59 = vld [vmem:[#allocation2] sm:$0x3]
    %v60 = vld [vmem:[#allocation2 + $0x2] sm:$0x3]
    %v61 = vld [vmem:[#allocation2 + $0x4] sm:$0x3]
    %v62 = vld [vmem:[#allocation2 + $0x6] sm:$0x3]
    %v63 = vld [vmem:[#allocation2 + $0x8] sm:$0x3]
    %v64 = vld [vmem:[#allocation2 + $0xa] sm:$0x3]
    %v65 = vld [vmem:[#allocation2 + $0xc] sm:$0x3]
    %v66 = vld [vmem:[#allocation2 + $0xe] sm:$0x3]
    %v67 = vlaneseq
    %v68 = vshrl.u32 %v67, 7
    %v69 = vsub.s32 0, %v68
    %v70 = vrot.slane %v59, %v69
    %v71 = vlaneseq
    %v72 = vshrl.u32 %v71, 7
    %v73 = vsub.s32 0, %v72
    %v74 = vrot.slane %v60, %v73
    %v75 = vlaneseq
    %v76 = vshrl.u32 %v75, 7
    %v77 = vsub.s32 0, %v76
    %v78 = vrot.slane %v61, %v77
    %v79 = vlaneseq
    %v80 = vshrl.u32 %v79, 7
    %v81 = vsub.s32 0, %v80
    %v82 = vrot.slane %v62, %v81
    %v83 = vlaneseq
    %v84 = vshrl.u32 %v83, 7
    %v85 = vsub.s32 0, %v84
    %v86 = vrot.slane %v63, %v85
    %v87 = vlaneseq
    %v88 = vshrl.u32 %v87, 7
    %v89 = vsub.s32 0, %v88
    %v90 = vrot.slane %v64, %v89
    %v91 = vlaneseq
    %v92 = vshrl.u32 %v91, 7
    %v93 = vsub.s32 0, %v92
    %v94 = vrot.slane %v65, %v93
    %v95 = vlaneseq
    %v96 = vshrl.u32 %v95, 7
    %v97 = vsub.s32 0, %v96
    %v98 = vrot.slane %v66, %v97
    %v107 = vrot.slane %v60, 7
    %vm108 = vcmask 1041409
    %v109 = vsel %vm108, %v107, %v59
    %v110 = vrot.slane %v61, 6
    %vm111 = vcmask 1042434
    %v112 = vsel %vm111, %v110, %v109
    %v113 = vrot.slane %v62, 5
    %vm114 = vcmask 1043459
    %v115 = vsel %vm114, %v113, %v112
    %v116 = vrot.slane %v63, 4
    %vm117 = vcmask 1044484
    %v118 = vsel %vm117, %v116, %v115
    %v119 = vrot.slane %v64, 3
    %vm120 = vcmask 1045509
    %v121 = vsel %vm120, %v119, %v118
    %v122 = vrot.slane %v65, 2
    %vm123 = vcmask 1046534
    %v124 = vsel %vm123, %v122, %v121
    %v125 = vrot.slane %v66, 1
    %vm126 = vcmask 1047559
    %v127 = vsel %vm126, %v125, %v124
    %v129 = vsub.f32 %v70, %v127
    %v130 = vsub.f32 %v74, %v127
    %v131 = vsub.f32 %v78, %v127
    %v132 = vsub.f32 %v82, %v127
    %v133 = vsub.f32 %v86, %v127
    %v134 = vsub.f32 %v90, %v127
    %v135 = vsub.f32 %v94, %v127
    %v136 = vsub.f32 %v98, %v127
    %v137 = vmul.f32 %v129, %v129
    %v138 = vmul.f32 %v130, %v130
    %v139 = vmul.f32 %v131, %v131
    %v140 = vmul.f32 %v132, %v132
    %v141 = vmul.f32 %v133, %v133
    %v142 = vmul.f32 %v134, %v134
    %v143 = vmul.f32 %v135, %v135
    %v144 = vmul.f32 %v136, %v136
    %v145 = vlaneseq
    %v146 = vshrl.u32 %v145, 7
    %v147 = vsub.s32 1, %v146
    %v148 = vrot.slane %v59, %v147
    %v149 = vlaneseq
    %v150 = vshrl.u32 %v149, 7
    %v151 = vsub.s32 1, %v150
    %v152 = vrot.slane %v60, %v151
    %v153 = vlaneseq
    %v154 = vshrl.u32 %v153, 7
    %v155 = vsub.s32 1, %v154
    %v156 = vrot.slane %v61, %v155
    %v157 = vlaneseq
    %v158 = vshrl.u32 %v157, 7
    %v159 = vsub.s32 1, %v158
    %v160 = vrot.slane %v62, %v159
    %v161 = vlaneseq
    %v162 = vshrl.u32 %v161, 7
    %v163 = vsub.s32 1, %v162
    %v164 = vrot.slane %v63, %v163
    %v165 = vlaneseq
    %v166 = vshrl.u32 %v165, 7
    %v167 = vsub.s32 1, %v166
    %v168 = vrot.slane %v64, %v167
    %v169 = vlaneseq
    %v170 = vshrl.u32 %v169, 7
    %v171 = vsub.s32 1, %v170
    %v172 = vrot.slane %v65, %v171
    %v173 = vlaneseq
    %v174 = vshrl.u32 %v173, 7
    %v175 = vsub.s32 1, %v174
    %v176 = vrot.slane %v66, %v175
    %v177 = vrot.slane %v59, 1
    %v178 = vsel %vm108, %v60, %v177
    %v179 = vrot.slane %v61, 7
    %v180 = vsel %vm111, %v179, %v178
    %v181 = vrot.slane %v62, 6
    %v182 = vsel %vm114, %v181, %v180
    %v183 = vrot.slane %v63, 5
    %v184 = vsel %vm117, %v183, %v182
    %v185 = vrot.slane %v64, 4
    %v186 = vsel %vm120, %v185, %v184
    %v187 = vrot.slane %v65, 3
    %v188 = vsel %vm123, %v187, %v186
    %v189 = vrot.slane %v66, 2
    %v190 = vsel %vm126, %v189, %v188
    %v192 = vsub.f32 %v148, %v190
    %v193 = vsub.f32 %v152, %v190
    %v194 = vsub.f32 %v156, %v190
    %v195 = vsub.f32 %v160, %v190
    %v196 = vsub.f32 %v164, %v190
    %v197 = vsub.f32 %v168, %v190
    %v198 = vsub.f32 %v172, %v190
    %v199 = vsub.f32 %v176, %v190
    %v200 = vmul.f32 %v192, %v192
    %v201 = vmul.f32 %v193, %v193
    %v202 = vmul.f32 %v194, %v194
    %v203 = vmul.f32 %v195, %v195
    %v204 = vmul.f32 %v196, %v196
    %v205 = vmul.f32 %v197, %v197
    %v206 = vmul.f32 %v198, %v198
    %v207 = vmul.f32 %v199, %v199
    %v208 = vadd.f32 %v137, %v200
    %v209 = vadd.f32 %v138, %v201
    %v210 = vadd.f32 %v139, %v202
    %v211 = vadd.f32 %v140, %v203
    %v212 = vadd.f32 %v141, %v204
    %v213 = vadd.f32 %v142, %v205
    %v214 = vadd.f32 %v143, %v206
    %v215 = vadd.f32 %v144, %v207
    %v216 = vrsqrt.pop %v208
    %v217 = vmul.f32 %v208, %v216
    %vm218 = vcmp.eq.f32.partialorder %v208, inf
    %v219 = vsel %vm218, %v208, %v217
    %vm220 = vcmp.eq.f32.partialorder %v208, 0.0
    %v221 = vand.u32 %v208, 2147483648
    %v222 = vsel %vm220, %v221, %v219
    %v223 = vrsqrt.pop %v209
    %v224 = vmul.f32 %v209, %v223
    %vm225 = vcmp.eq.f32.partialorder %v209, inf
    %v226 = vsel %vm225, %v209, %v224
    %vm227 = vcmp.eq.f32.partialorder %v209, 0.0
    %v228 = vand.u32 %v209, 2147483648
    %v229 = vsel %vm227, %v228, %v226
    %v230 = vrsqrt.pop %v210
    %v231 = vmul.f32 %v210, %v230
    %vm232 = vcmp.eq.f32.partialorder %v210, inf
    %v233 = vsel %vm232, %v210, %v231
    %vm234 = vcmp.eq.f32.partialorder %v210, 0.0
    %v235 = vand.u32 %v210, 2147483648
    %v236 = vsel %vm234, %v235, %v233
    %v237 = vrsqrt.pop %v211
    %v238 = vmul.f32 %v211, %v237
    %vm239 = vcmp.eq.f32.partialorder %v211, inf
    %v240 = vsel %vm239, %v211, %v238
    %vm241 = vcmp.eq.f32.partialorder %v211, 0.0
    %v242 = vand.u32 %v211, 2147483648
    %v243 = vsel %vm241, %v242, %v240
    %v244 = vrsqrt.pop %v212
    %v245 = vmul.f32 %v212, %v244
    %vm246 = vcmp.eq.f32.partialorder %v212, inf
    %v247 = vsel %vm246, %v212, %v245
    %vm248 = vcmp.eq.f32.partialorder %v212, 0.0
    %v249 = vand.u32 %v212, 2147483648
    %v250 = vsel %vm248, %v249, %v247
    %v251 = vrsqrt.pop %v213
    %v252 = vmul.f32 %v213, %v251
    %vm253 = vcmp.eq.f32.partialorder %v213, inf
    %v254 = vsel %vm253, %v213, %v252
    %vm255 = vcmp.eq.f32.partialorder %v213, 0.0
    %v256 = vand.u32 %v213, 2147483648
    %v257 = vsel %vm255, %v256, %v254
    %v258 = vrsqrt.pop %v214
    %v259 = vmul.f32 %v214, %v258
    %vm260 = vcmp.eq.f32.partialorder %v214, inf
    %v261 = vsel %vm260, %v214, %v259
    %vm262 = vcmp.eq.f32.partialorder %v214, 0.0
    %v263 = vand.u32 %v214, 2147483648
    %v264 = vsel %vm262, %v263, %v261
    %v265 = vrsqrt.pop %v215
    %v266 = vmul.f32 %v215, %v265
    %vm267 = vcmp.eq.f32.partialorder %v215, inf
    %v268 = vsel %vm267, %v215, %v266
    %vm269 = vcmp.eq.f32.partialorder %v215, 0.0
    %v270 = vand.u32 %v215, 2147483648
    %v271 = vsel %vm269, %v270, %v268
    %v272 = vmul.f32 %v222, -0.5
    %v273 = vmul.f32 %v229, -0.5
    %v274 = vmul.f32 %v236, -0.5
    %v275 = vmul.f32 %v243, -0.5
    %v276 = vmul.f32 %v250, -0.5
    %v277 = vmul.f32 %v257, -0.5
    %v278 = vmul.f32 %v264, -0.5
    %v279 = vmul.f32 %v271, -0.5
    %v280 = vmul.f32 %v272, 1.442695
    %v281 = vpow.pop %v280
    %v282 = vmul.f32 %v273, 1.442695
    %v283 = vpow.pop %v282
    %v284 = vmul.f32 %v274, 1.442695
    %v285 = vpow.pop %v284
    %v286 = vmul.f32 %v275, 1.442695
    %v287 = vpow.pop %v286
    %v288 = vmul.f32 %v276, 1.442695
    %v289 = vpow.pop %v288
    %v290 = vmul.f32 %v277, 1.442695
    %v291 = vpow.pop %v290
    %v292 = vmul.f32 %v278, 1.442695
    %v293 = vpow.pop %v292
    %v294 = vmul.f32 %v279, 1.442695
    %v295 = vpow.pop %v294
    %v296 = vadd.f32 %v281, %v49
    %v297 = vadd.f32 %v283, %v50
    %v298 = vadd.f32 %v285, %v51
    %v299 = vadd.f32 %v287, %v52
    %v300 = vadd.f32 %v289, %v53
    %v301 = vadd.f32 %v291, %v54
    %v302 = vadd.f32 %v293, %v55
    %v303 = vadd.f32 %v295, %v56
    %v304 = vrcp.pop %v296
    %v305 = vlaneseq
    %v306 = vshrl.u32 %v305, 7
    %v307 = vsub.s32 0, %v306
    %v308 = vrot.slane %v304, %v307
    %v309 = vmul.f32 %v41, %v308
    %v310 = vsub.f32 %v296, %v57
    %v311 = vsub.f32 %v297, %v58
    %v312 = vsub.f32 %v298, %v58
    %v313 = vsub.f32 %v299, %v58
    %v314 = vsub.f32 %v300, %v58
    %v315 = vsub.f32 %v301, %v58
    %v316 = vsub.f32 %v302, %v58
    %v317 = vsub.f32 %v303, %v58
    %v318 = vlaneseq
    %v319 = vshrl.u32 %v318, 7
    %v320 = vsub.s32 0, %v319
    %v321 = vrot.slane %v310, %v320
    %v322 = vlaneseq
    %v323 = vshrl.u32 %v322, 7
    %v324 = vsub.s32 0, %v323
    %v325 = vrot.slane %v311, %v324
    %v326 = vlaneseq
    %v327 = vshrl.u32 %v326, 7
    %v328 = vsub.s32 0, %v327
    %v329 = vrot.slane %v312, %v328
    %v330 = vlaneseq
    %v331 = vshrl.u32 %v330, 7
    %v332 = vsub.s32 0, %v331
    %v333 = vrot.slane %v313, %v332
    %v334 = vlaneseq
    %v335 = vshrl.u32 %v334, 7
    %v336 = vsub.s32 0, %v335
    %v337 = vrot.slane %v314, %v336
    %v338 = vlaneseq
    %v339 = vshrl.u32 %v338, 7
    %v340 = vsub.s32 0, %v339
    %v341 = vrot.slane %v315, %v340
    %v342 = vlaneseq
    %v343 = vshrl.u32 %v342, 7
    %v344 = vsub.s32 0, %v343
    %v345 = vrot.slane %v316, %v344
    %v346 = vlaneseq
    %v347 = vshrl.u32 %v346, 7
    %v348 = vsub.s32 0, %v347
    %v349 = vrot.slane %v317, %v348
    %v350 = vmul.f32 %v321, %v309
    %v351 = vmul.f32 %v325, %v309
    %v352 = vmul.f32 %v329, %v309
    %v353 = vmul.f32 %v333, %v309
    %v354 = vmul.f32 %v337, %v309
    %v355 = vmul.f32 %v341, %v309
    %v356 = vmul.f32 %v345, %v309
    %v357 = vmul.f32 %v349, %v309
    %v358 = vsub.f32 %v41, %v350
    %v359 = vsub.f32 %v42, %v351
    %v360 = vsub.f32 %v43, %v352
    %v361 = vsub.f32 %v44, %v353
    %v362 = vsub.f32 %v45, %v354
    %v363 = vsub.f32 %v46, %v355
    %v364 = vsub.f32 %v47, %v356
    %v365 = vsub.f32 %v48, %v357
    %v366 = vmul.f32 %v296, %v308
    %v367 = vmul.f32 %v321, %v366
    %v368 = vmul.f32 %v325, %v366
    %v369 = vmul.f32 %v329, %v366
    %v370 = vmul.f32 %v333, %v366
    %v371 = vmul.f32 %v337, %v366
    %v372 = vmul.f32 %v341, %v366
    %v373 = vmul.f32 %v345, %v366
    %v374 = vmul.f32 %v349, %v366
    %v375 = vsub.f32 %v296, %v367
    %v376 = vsub.f32 %v297, %v368
    %v377 = vsub.f32 %v298, %v369
    %v378 = vsub.f32 %v299, %v370
    %v379 = vsub.f32 %v300, %v371
    %v380 = vsub.f32 %v301, %v372
    %v381 = vsub.f32 %v302, %v373
    %v382 = vsub.f32 %v303, %v374
    %v383 = vrcp.pop %v376
    %v384 = vlaneseq
    %v385 = vshrl.u32 %v384, 7
    %v386 = vsub.s32 1, %v385
    %v387 = vrot.slane %v383, %v386
    %v388 = vmul.f32 %v359, %v387
    %v389 = vsub.f32 %v375, %v58
    %v390 = vsub.f32 %v376, %v57
    %v391 = vsub.f32 %v377, %v58
    %v392 = vsub.f32 %v378, %v58
    %v393 = vsub.f32 %v379, %v58
    %v394 = vsub.f32 %v380, %v58
    %v395 = vsub.f32 %v381, %v58
    %v396 = vsub.f32 %v382, %v58
    %v397 = vlaneseq
    %v398 = vshrl.u32 %v397, 7
    %v399 = vsub.s32 1, %v398
    %v400 = vrot.slane %v389, %v399
    %v401 = vlaneseq
    %v402 = vshrl.u32 %v401, 7
    %v403 = vsub.s32 1, %v402
    %v404 = vrot.slane %v390, %v403
    %v405 = vlaneseq
    %v406 = vshrl.u32 %v405, 7
    %v407 = vsub.s32 1, %v406
    %v408 = vrot.slane %v391, %v407
    %v409 = vlaneseq
    %v410 = vshrl.u32 %v409, 7
    %v411 = vsub.s32 1, %v410
    %v412 = vrot.slane %v392, %v411
    %v413 = vlaneseq
    %v414 = vshrl.u32 %v413, 7
    %v415 = vsub.s32 1, %v414
    %v416 = vrot.slane %v393, %v415
    %v417 = vlaneseq
    %v418 = vshrl.u32 %v417, 7
    %v419 = vsub.s32 1, %v418
    %v420 = vrot.slane %v394, %v419
    %v421 = vlaneseq
    %v422 = vshrl.u32 %v421, 7
    %v423 = vsub.s32 1, %v422
    %v424 = vrot.slane %v395, %v423
    %v425 = vlaneseq
    %v426 = vshrl.u32 %v425, 7
    %v427 = vsub.s32 1, %v426
    %v428 = vrot.slane %v396, %v427
    %v429 = vmul.f32 %v400, %v388
    %v430 = vmul.f32 %v404, %v388
    %v431 = vmul.f32 %v408, %v388
    %v432 = vmul.f32 %v412, %v388
    %v433 = vmul.f32 %v416, %v388
    %v434 = vmul.f32 %v420, %v388
    %v435 = vmul.f32 %v424, %v388
    %v436 = vmul.f32 %v428, %v388
    %v437 = vsub.f32 %v358, %v429
    %v438 = vsub.f32 %v359, %v430
    %v439 = vsub.f32 %v360, %v431
    %v440 = vsub.f32 %v361, %v432
    %v441 = vsub.f32 %v362, %v433
    %v442 = vsub.f32 %v363, %v434
    %v443 = vsub.f32 %v364, %v435
    %v444 = vsub.f32 %v365, %v436
    %v445 = vmul.f32 %v376, %v387
    %v446 = vmul.f32 %v400, %v445
    %v447 = vmul.f32 %v404, %v445
    %v448 = vmul.f32 %v408, %v445
    %v449 = vmul.f32 %v412, %v445
    %v450 = vmul.f32 %v416, %v445
    %v451 = vmul.f32 %v420, %v445
    %v452 = vmul.f32 %v424, %v445
    %v453 = vmul.f32 %v428, %v445
    %v454 = vsub.f32 %v375, %v446
    %v455 = vsub.f32 %v376, %v447
    %v456 = vsub.f32 %v377, %v448
    %v457 = vsub.f32 %v378, %v449
    %v458 = vsub.f32 %v379, %v450
    %v459 = vsub.f32 %v380, %v451
    %v460 = vsub.f32 %v381, %v452
    %v461 = vsub.f32 %v382, %v453
    %v462 = vrcp.pop %v456
    %v463 = vlaneseq
    %v464 = vshrl.u32 %v463, 7
    %v465 = vsub.s32 2, %v464
    %v466 = vrot.slane %v462, %v465
    %v467 = vmul.f32 %v439, %v466
    %v468 = vsub.f32 %v454, %v58
    %v469 = vsub.f32 %v455, %v58
    %v470 = vsub.f32 %v456, %v57
    %v471 = vsub.f32 %v457, %v58
    %v472 = vsub.f32 %v458, %v58
    %v473 = vsub.f32 %v459, %v58
    %v474 = vsub.f32 %v460, %v58
    %v475 = vsub.f32 %v461, %v58
    %v476 = vlaneseq
    %v477 = vshrl.u32 %v476, 7
    %v478 = vsub.s32 2, %v477
    %v479 = vrot.slane %v468, %v478
    %v480 = vlaneseq
    %v481 = vshrl.u32 %v480, 7
    %v482 = vsub.s32 2, %v481
    %v483 = vrot.slane %v469, %v482
    %v484 = vlaneseq
    %v485 = vshrl.u32 %v484, 7
    %v486 = vsub.s32 2, %v485
    %v487 = vrot.slane %v470, %v486
    %v488 = vlaneseq
    %v489 = vshrl.u32 %v488, 7
    %v490 = vsub.s32 2, %v489
    %v491 = vrot.slane %v471, %v490
    %v492 = vlaneseq
    %v493 = vshrl.u32 %v492, 7
    %v494 = vsub.s32 2, %v493
    %v495 = vrot.slane %v472, %v494
    %v496 = vlaneseq
    %v497 = vshrl.u32 %v496, 7
    %v498 = vsub.s32 2, %v497
    %v499 = vrot.slane %v473, %v498
    %v500 = vlaneseq
    %v501 = vshrl.u32 %v500, 7
    %v502 = vsub.s32 2, %v501
    %v503 = vrot.slane %v474, %v502
    %v504 = vlaneseq
    %v505 = vshrl.u32 %v504, 7
    %v506 = vsub.s32 2, %v505
    %v507 = vrot.slane %v475, %v506
    %v508 = vmul.f32 %v479, %v467
    %v509 = vmul.f32 %v483, %v467
    %v510 = vmul.f32 %v487, %v467
    %v511 = vmul.f32 %v491, %v467
    %v512 = vmul.f32 %v495, %v467
    %v513 = vmul.f32 %v499, %v467
    %v514 = vmul.f32 %v503, %v467
    %v515 = vmul.f32 %v507, %v467
    %v516 = vsub.f32 %v437, %v508
    %v517 = vsub.f32 %v438, %v509
    %v518 = vsub.f32 %v439, %v510
    %v519 = vsub.f32 %v440, %v511
    %v520 = vsub.f32 %v441, %v512
    %v521 = vsub.f32 %v442, %v513
    %v522 = vsub.f32 %v443, %v514
    %v523 = vsub.f32 %v444, %v515
    %v524 = vmul.f32 %v456, %v466
    %v525 = vmul.f32 %v479, %v524
    %v526 = vmul.f32 %v483, %v524
    %v527 = vmul.f32 %v487, %v524
    %v528 = vmul.f32 %v491, %v524
    %v529 = vmul.f32 %v495, %v524
    %v530 = vmul.f32 %v499, %v524
    %v531 = vmul.f32 %v503, %v524
    %v532 = vmul.f32 %v507, %v524
    %v533 = vsub.f32 %v454, %v525
    %v534 = vsub.f32 %v455, %v526
    %v535 = vsub.f32 %v456, %v527
    %v536 = vsub.f32 %v457, %v528
    %v537 = vsub.f32 %v458, %v529
    %v538 = vsub.f32 %v459, %v530
    %v539 = vsub.f32 %v460, %v531
    %v540 = vsub.f32 %v461, %v532
    %v541 = vrcp.pop %v536
    %v542 = vlaneseq
    %v543 = vshrl.u32 %v542, 7
    %v544 = vsub.s32 3, %v543
    %v545 = vrot.slane %v541, %v544
    %v546 = vmul.f32 %v519, %v545
    %v547 = vsub.f32 %v533, %v58
    %v548 = vsub.f32 %v534, %v58
    %v549 = vsub.f32 %v535, %v58
    %v550 = vsub.f32 %v536, %v57
    %v551 = vsub.f32 %v537, %v58
    %v552 = vsub.f32 %v538, %v58
    %v553 = vsub.f32 %v539, %v58
    %v554 = vsub.f32 %v540, %v58
    %v555 = vlaneseq
    %v556 = vshrl.u32 %v555, 7
    %v557 = vsub.s32 3, %v556
    %v558 = vrot.slane %v547, %v557
    %v559 = vlaneseq
    %v560 = vshrl.u32 %v559, 7
    %v561 = vsub.s32 3, %v560
    %v562 = vrot.slane %v548, %v561
    %v563 = vlaneseq
    %v564 = vshrl.u32 %v563, 7
    %v565 = vsub.s32 3, %v564
    %v566 = vrot.slane %v549, %v565
    %v567 = vlaneseq
    %v568 = vshrl.u32 %v567, 7
    %v569 = vsub.s32 3, %v568
    %v570 = vrot.slane %v550, %v569
    %v571 = vlaneseq
    %v572 = vshrl.u32 %v571, 7
    %v573 = vsub.s32 3, %v572
    %v574 = vrot.slane %v551, %v573
    %v575 = vlaneseq
    %v576 = vshrl.u32 %v575, 7
    %v577 = vsub.s32 3, %v576
    %v578 = vrot.slane %v552, %v577
    %v579 = vlaneseq
    %v580 = vshrl.u32 %v579, 7
    %v581 = vsub.s32 3, %v580
    %v582 = vrot.slane %v553, %v581
    %v583 = vlaneseq
    %v584 = vshrl.u32 %v583, 7
    %v585 = vsub.s32 3, %v584
    %v586 = vrot.slane %v554, %v585
    %v587 = vmul.f32 %v558, %v546
    %v588 = vmul.f32 %v562, %v546
    %v589 = vmul.f32 %v566, %v546
    %v590 = vmul.f32 %v570, %v546
    %v591 = vmul.f32 %v574, %v546
    %v592 = vmul.f32 %v578, %v546
    %v593 = vmul.f32 %v582, %v546
    %v594 = vmul.f32 %v586, %v546
    %v595 = vsub.f32 %v516, %v587
    %v596 = vsub.f32 %v517, %v588
    %v597 = vsub.f32 %v518, %v589
    %v598 = vsub.f32 %v519, %v590
    %v599 = vsub.f32 %v520, %v591
    %v600 = vsub.f32 %v521, %v592
    %v601 = vsub.f32 %v522, %v593
    %v602 = vsub.f32 %v523, %v594
    %v603 = vmul.f32 %v536, %v545
    %v604 = vmul.f32 %v558, %v603
    %v605 = vmul.f32 %v562, %v603
    %v606 = vmul.f32 %v566, %v603
    %v607 = vmul.f32 %v570, %v603
    %v608 = vmul.f32 %v574, %v603
    %v609 = vmul.f32 %v578, %v603
    %v610 = vmul.f32 %v582, %v603
    %v611 = vmul.f32 %v586, %v603
    %v612 = vsub.f32 %v533, %v604
    %v613 = vsub.f32 %v534, %v605
    %v614 = vsub.f32 %v535, %v606
    %v615 = vsub.f32 %v536, %v607
    %v616 = vsub.f32 %v537, %v608
    %v617 = vsub.f32 %v538, %v609
    %v618 = vsub.f32 %v539, %v610
    %v619 = vsub.f32 %v540, %v611
    %v620 = vrcp.pop %v616
    %v621 = vlaneseq
    %v622 = vshrl.u32 %v621, 7
    %v623 = vsub.s32 4, %v622
    %v624 = vrot.slane %v620, %v623
    %v625 = vmul.f32 %v599, %v624
    %v626 = vsub.f32 %v612, %v58
    %v627 = vsub.f32 %v613, %v58
    %v628 = vsub.f32 %v614, %v58
    %v629 = vsub.f32 %v615, %v58
    %v630 = vsub.f32 %v616, %v57
    %v631 = vsub.f32 %v617, %v58
    %v632 = vsub.f32 %v618, %v58
    %v633 = vsub.f32 %v619, %v58
    %v634 = vlaneseq
    %v635 = vshrl.u32 %v634, 7
    %v636 = vsub.s32 4, %v635
    %v637 = vrot.slane %v626, %v636
    %v638 = vlaneseq
    %v639 = vshrl.u32 %v638, 7
    %v640 = vsub.s32 4, %v639
    %v641 = vrot.slane %v627, %v640
    %v642 = vlaneseq
    %v643 = vshrl.u32 %v642, 7
    %v644 = vsub.s32 4, %v643
    %v645 = vrot.slane %v628, %v644
    %v646 = vlaneseq
    %v647 = vshrl.u32 %v646, 7
    %v648 = vsub.s32 4, %v647
    %v649 = vrot.slane %v629, %v648
    %v650 = vlaneseq
    %v651 = vshrl.u32 %v650, 7
    %v652 = vsub.s32 4, %v651
    %v653 = vrot.slane %v630, %v652
    %v654 = vlaneseq
    %v655 = vshrl.u32 %v654, 7
    %v656 = vsub.s32 4, %v655
    %v657 = vrot.slane %v631, %v656
    %v658 = vlaneseq
    %v659 = vshrl.u32 %v658, 7
    %v660 = vsub.s32 4, %v659
    %v661 = vrot.slane %v632, %v660
    %v662 = vlaneseq
    %v663 = vshrl.u32 %v662, 7
    %v664 = vsub.s32 4, %v663
    %v665 = vrot.slane %v633, %v664
    %v666 = vmul.f32 %v637, %v625
    %v667 = vmul.f32 %v641, %v625
    %v668 = vmul.f32 %v645, %v625
    %v669 = vmul.f32 %v649, %v625
    %v670 = vmul.f32 %v653, %v625
    %v671 = vmul.f32 %v657, %v625
    %v672 = vmul.f32 %v661, %v625
    %v673 = vmul.f32 %v665, %v625
    %v674 = vsub.f32 %v595, %v666
    %v675 = vsub.f32 %v596, %v667
    %v676 = vsub.f32 %v597, %v668
    %v677 = vsub.f32 %v598, %v669
    %v678 = vsub.f32 %v599, %v670
    %v679 = vsub.f32 %v600, %v671
    %v680 = vsub.f32 %v601, %v672
    %v681 = vsub.f32 %v602, %v673
    %v682 = vmul.f32 %v616, %v624
    %v683 = vmul.f32 %v637, %v682
    %v684 = vmul.f32 %v641, %v682
    %v685 = vmul.f32 %v645, %v682
    %v686 = vmul.f32 %v649, %v682
    %v687 = vmul.f32 %v653, %v682
    %v688 = vmul.f32 %v657, %v682
    %v689 = vmul.f32 %v661, %v682
    %v690 = vmul.f32 %v665, %v682
    %v691 = vsub.f32 %v612, %v683
    %v692 = vsub.f32 %v613, %v684
    %v693 = vsub.f32 %v614, %v685
    %v694 = vsub.f32 %v615, %v686
    %v695 = vsub.f32 %v616, %v687
    %v696 = vsub.f32 %v617, %v688
    %v697 = vsub.f32 %v618, %v689
    %v698 = vsub.f32 %v619, %v690
    %v699 = vrcp.pop %v696
    %v700 = vlaneseq
    %v701 = vshrl.u32 %v700, 7
    %v702 = vsub.s32 5, %v701
    %v703 = vrot.slane %v699, %v702
    %v704 = vmul.f32 %v679, %v703
    %v705 = vsub.f32 %v691, %v58
    %v706 = vsub.f32 %v692, %v58
    %v707 = vsub.f32 %v693, %v58
    %v708 = vsub.f32 %v694, %v58
    %v709 = vsub.f32 %v695, %v58
    %v710 = vsub.f32 %v696, %v57
    %v711 = vsub.f32 %v697, %v58
    %v712 = vsub.f32 %v698, %v58
    %v713 = vlaneseq
    %v714 = vshrl.u32 %v713, 7
    %v715 = vsub.s32 5, %v714
    %v716 = vrot.slane %v705, %v715
    %v717 = vlaneseq
    %v718 = vshrl.u32 %v717, 7
    %v719 = vsub.s32 5, %v718
    %v720 = vrot.slane %v706, %v719
    %v721 = vlaneseq
    %v722 = vshrl.u32 %v721, 7
    %v723 = vsub.s32 5, %v722
    %v724 = vrot.slane %v707, %v723
    %v725 = vlaneseq
    %v726 = vshrl.u32 %v725, 7
    %v727 = vsub.s32 5, %v726
    %v728 = vrot.slane %v708, %v727
    %v729 = vlaneseq
    %v730 = vshrl.u32 %v729, 7
    %v731 = vsub.s32 5, %v730
    %v732 = vrot.slane %v709, %v731
    %v733 = vlaneseq
    %v734 = vshrl.u32 %v733, 7
    %v735 = vsub.s32 5, %v734
    %v736 = vrot.slane %v710, %v735
    %v737 = vlaneseq
    %v738 = vshrl.u32 %v737, 7
    %v739 = vsub.s32 5, %v738
    %v740 = vrot.slane %v711, %v739
    %v741 = vlaneseq
    %v742 = vshrl.u32 %v741, 7
    %v743 = vsub.s32 5, %v742
    %v744 = vrot.slane %v712, %v743
    %v745 = vmul.f32 %v716, %v704
    %v746 = vmul.f32 %v720, %v704
    %v747 = vmul.f32 %v724, %v704
    %v748 = vmul.f32 %v728, %v704
    %v749 = vmul.f32 %v732, %v704
    %v750 = vmul.f32 %v736, %v704
    %v751 = vmul.f32 %v740, %v704
    %v752 = vmul.f32 %v744, %v704
    %v753 = vsub.f32 %v674, %v745
    %v754 = vsub.f32 %v675, %v746
    %v755 = vsub.f32 %v676, %v747
    %v756 = vsub.f32 %v677, %v748
    %v757 = vsub.f32 %v678, %v749
    %v758 = vsub.f32 %v679, %v750
    %v759 = vsub.f32 %v680, %v751
    %v760 = vsub.f32 %v681, %v752
    %v761 = vmul.f32 %v696, %v703
    %v762 = vmul.f32 %v716, %v761
    %v763 = vmul.f32 %v720, %v761
    %v764 = vmul.f32 %v724, %v761
    %v765 = vmul.f32 %v728, %v761
    %v766 = vmul.f32 %v732, %v761
    %v767 = vmul.f32 %v736, %v761
    %v768 = vmul.f32 %v740, %v761
    %v769 = vmul.f32 %v744, %v761
    %v770 = vsub.f32 %v691, %v762
    %v771 = vsub.f32 %v692, %v763
    %v772 = vsub.f32 %v693, %v764
    %v773 = vsub.f32 %v694, %v765
    %v774 = vsub.f32 %v695, %v766
    %v775 = vsub.f32 %v696, %v767
    %v776 = vsub.f32 %v697, %v768
    %v777 = vsub.f32 %v698, %v769
    %v778 = vrcp.pop %v776
    %v779 = vlaneseq
    %v780 = vshrl.u32 %v779, 7
    %v781 = vsub.s32 6, %v780
    %v782 = vrot.slane %v778, %v781
    %v783 = vmul.f32 %v759, %v782
    %v784 = vsub.f32 %v770, %v58
    %v785 = vsub.f32 %v771, %v58
    %v786 = vsub.f32 %v772, %v58
    %v787 = vsub.f32 %v773, %v58
    %v788 = vsub.f32 %v774, %v58
    %v789 = vsub.f32 %v775, %v58
    %v790 = vsub.f32 %v776, %v57
    %v791 = vsub.f32 %v777, %v58
    %v792 = vlaneseq
    %v793 = vshrl.u32 %v792, 7
    %v794 = vsub.s32 6, %v793
    %v795 = vrot.slane %v784, %v794
    %v796 = vlaneseq
    %v797 = vshrl.u32 %v796, 7
    %v798 = vsub.s32 6, %v797
    %v799 = vrot.slane %v785, %v798
    %v800 = vlaneseq
    %v801 = vshrl.u32 %v800, 7
    %v802 = vsub.s32 6, %v801
    %v803 = vrot.slane %v786, %v802
    %v804 = vlaneseq
    %v805 = vshrl.u32 %v804, 7
    %v806 = vsub.s32 6, %v805
    %v807 = vrot.slane %v787, %v806
    %v808 = vlaneseq
    %v809 = vshrl.u32 %v808, 7
    %v810 = vsub.s32 6, %v809
    %v811 = vrot.slane %v788, %v810
    %v812 = vlaneseq
    %v813 = vshrl.u32 %v812, 7
    %v814 = vsub.s32 6, %v813
    %v815 = vrot.slane %v789, %v814
    %v816 = vlaneseq
    %v817 = vshrl.u32 %v816, 7
    %v818 = vsub.s32 6, %v817
    %v819 = vrot.slane %v790, %v818
    %v820 = vlaneseq
    %v821 = vshrl.u32 %v820, 7
    %v822 = vsub.s32 6, %v821
    %v823 = vrot.slane %v791, %v822
    %v824 = vmul.f32 %v795, %v783
    %v825 = vmul.f32 %v799, %v783
    %v826 = vmul.f32 %v803, %v783
    %v827 = vmul.f32 %v807, %v783
    %v828 = vmul.f32 %v811, %v783
    %v829 = vmul.f32 %v815, %v783
    %v830 = vmul.f32 %v819, %v783
    %v831 = vmul.f32 %v823, %v783
    %v832 = vsub.f32 %v753, %v824
    %v833 = vsub.f32 %v754, %v825
    %v834 = vsub.f32 %v755, %v826
    %v835 = vsub.f32 %v756, %v827
    %v836 = vsub.f32 %v757, %v828
    %v837 = vsub.f32 %v758, %v829
    %v838 = vsub.f32 %v759, %v830
    %v839 = vsub.f32 %v760, %v831
    %v840 = vmul.f32 %v776, %v782
    %v841 = vmul.f32 %v795, %v840
    %v842 = vmul.f32 %v799, %v840
    %v843 = vmul.f32 %v803, %v840
    %v844 = vmul.f32 %v807, %v840
    %v845 = vmul.f32 %v811, %v840
    %v846 = vmul.f32 %v815, %v840
    %v847 = vmul.f32 %v819, %v840
    %v848 = vmul.f32 %v823, %v840
    %v849 = vsub.f32 %v770, %v841
    %v850 = vsub.f32 %v771, %v842
    %v851 = vsub.f32 %v772, %v843
    %v852 = vsub.f32 %v773, %v844
    %v853 = vsub.f32 %v774, %v845
    %v854 = vsub.f32 %v775, %v846
    %v855 = vsub.f32 %v776, %v847
    %v856 = vsub.f32 %v777, %v848
    %v857 = vrcp.pop %v856
    %v858 = vlaneseq
    %v859 = vshrl.u32 %v858, 7
    %v860 = vsub.s32 7, %v859
    %v861 = vrot.slane %v857, %v860
    %v862 = vmul.f32 %v839, %v861
    %v863 = vsub.f32 %v849, %v58
    %v864 = vsub.f32 %v850, %v58
    %v865 = vsub.f32 %v851, %v58
    %v866 = vsub.f32 %v852, %v58
    %v867 = vsub.f32 %v853, %v58
    %v868 = vsub.f32 %v854, %v58
    %v869 = vsub.f32 %v855, %v58
    %v870 = vsub.f32 %v856, %v57
    %v871 = vlaneseq
    %v872 = vshrl.u32 %v871, 7
    %v873 = vsub.s32 7, %v872
    %v874 = vrot.slane %v863, %v873
    %v875 = vlaneseq
    %v876 = vshrl.u32 %v875, 7
    %v877 = vsub.s32 7, %v876
    %v878 = vrot.slane %v864, %v877
    %v879 = vlaneseq
    %v880 = vshrl.u32 %v879, 7
    %v881 = vsub.s32 7, %v880
    %v882 = vrot.slane %v865, %v881
    %v883 = vlaneseq
    %v884 = vshrl.u32 %v883, 7
    %v885 = vsub.s32 7, %v884
    %v886 = vrot.slane %v866, %v885
    %v887 = vlaneseq
    %v888 = vshrl.u32 %v887, 7
    %v889 = vsub.s32 7, %v888
    %v890 = vrot.slane %v867, %v889
    %v891 = vlaneseq
    %v892 = vshrl.u32 %v891, 7
    %v893 = vsub.s32 7, %v892
    %v894 = vrot.slane %v868, %v893
    %v895 = vlaneseq
    %v896 = vshrl.u32 %v895, 7
    %v897 = vsub.s32 7, %v896
    %v898 = vrot.slane %v869, %v897
    %v899 = vlaneseq
    %v900 = vshrl.u32 %v899, 7
    %v901 = vsub.s32 7, %v900
    %v902 = vrot.slane %v870, %v901
    %v903 = vmul.f32 %v874, %v862
    %v904 = vmul.f32 %v878, %v862
    %v905 = vmul.f32 %v882, %v862
    %v906 = vmul.f32 %v886, %v862
    %v907 = vmul.f32 %v890, %v862
    %v908 = vmul.f32 %v894, %v862
    %v909 = vmul.f32 %v898, %v862
    %v910 = vmul.f32 %v902, %v862
    %v911 = vsub.f32 %v832, %v903
    %v912 = vsub.f32 %v833, %v904
    %v913 = vsub.f32 %v834, %v905
    %v914 = vsub.f32 %v835, %v906
    %v915 = vsub.f32 %v836, %v907
    %v916 = vsub.f32 %v837, %v908
    %v917 = vsub.f32 %v838, %v909
    %v918 = vsub.f32 %v839, %v910
    %s919 = scalar_lea.vmem [#allocation2], 16
    %v920 = vld [vmem:[%s919] sm:$0x3]
    %v921 = vld [vmem:[%s919 + $0x2] sm:$0x3]
    %v922 = vld [vmem:[%s919 + $0x4] sm:$0x3]
    %v923 = vld [vmem:[%s919 + $0x6] sm:$0x3]
    %v924 = vld [vmem:[%s919 + $0x8] sm:$0x3]
    %v925 = vld [vmem:[%s919 + $0xa] sm:$0x3]
    %v926 = vld [vmem:[%s919 + $0xc] sm:$0x3]
    %v927 = vld [vmem:[%s919 + $0xe] sm:$0x3]
    %v928 = vlaneseq
    %v929 = vshrl.u32 %v928, 7
    %v930 = vsub.s32 0, %v929
    %v931 = vrot.slane %v920, %v930
    %v932 = vlaneseq
    %v933 = vshrl.u32 %v932, 7
    %v934 = vsub.s32 0, %v933
    %v935 = vrot.slane %v921, %v934
    %v936 = vlaneseq
    %v937 = vshrl.u32 %v936, 7
    %v938 = vsub.s32 0, %v937
    %v939 = vrot.slane %v922, %v938
    %v940 = vlaneseq
    %v941 = vshrl.u32 %v940, 7
    %v942 = vsub.s32 0, %v941
    %v943 = vrot.slane %v923, %v942
    %v944 = vlaneseq
    %v945 = vshrl.u32 %v944, 7
    %v946 = vsub.s32 0, %v945
    %v947 = vrot.slane %v924, %v946
    %v948 = vlaneseq
    %v949 = vshrl.u32 %v948, 7
    %v950 = vsub.s32 0, %v949
    %v951 = vrot.slane %v925, %v950
    %v952 = vlaneseq
    %v953 = vshrl.u32 %v952, 7
    %v954 = vsub.s32 0, %v953
    %v955 = vrot.slane %v926, %v954
    %v956 = vlaneseq
    %v957 = vshrl.u32 %v956, 7
    %v958 = vsub.s32 0, %v957
    %v959 = vrot.slane %v927, %v958
    %v968 = vrot.slane %v921, 7
    %v969 = vsel %vm108, %v968, %v920
    %v970 = vrot.slane %v922, 6
    %v971 = vsel %vm111, %v970, %v969
    %v972 = vrot.slane %v923, 5
    %v973 = vsel %vm114, %v972, %v971
    %v974 = vrot.slane %v924, 4
    %v975 = vsel %vm117, %v974, %v973
    %v976 = vrot.slane %v925, 3
    %v977 = vsel %vm120, %v976, %v975
    %v978 = vrot.slane %v926, 2
    %v979 = vsel %vm123, %v978, %v977
    %v980 = vrot.slane %v927, 1
    %v981 = vsel %vm126, %v980, %v979
    %v983 = vsub.f32 %v931, %v981
    %v984 = vsub.f32 %v935, %v981
    %v985 = vsub.f32 %v939, %v981
    %v986 = vsub.f32 %v943, %v981
    %v987 = vsub.f32 %v947, %v981
    %v988 = vsub.f32 %v951, %v981
    %v989 = vsub.f32 %v955, %v981
    %v990 = vsub.f32 %v959, %v981
    %v991 = vmul.f32 %v983, %v983
    %v992 = vmul.f32 %v984, %v984
    %v993 = vmul.f32 %v985, %v985
    %v994 = vmul.f32 %v986, %v986
    %v995 = vmul.f32 %v987, %v987
    %v996 = vmul.f32 %v988, %v988
    %v997 = vmul.f32 %v989, %v989
    %v998 = vmul.f32 %v990, %v990
    %v999 = vlaneseq
    %v1000 = vshrl.u32 %v999, 7
    %v1001 = vsub.s32 1, %v1000
    %v1002 = vrot.slane %v920, %v1001
    %v1003 = vlaneseq
    %v1004 = vshrl.u32 %v1003, 7
    %v1005 = vsub.s32 1, %v1004
    %v1006 = vrot.slane %v921, %v1005
    %v1007 = vlaneseq
    %v1008 = vshrl.u32 %v1007, 7
    %v1009 = vsub.s32 1, %v1008
    %v1010 = vrot.slane %v922, %v1009
    %v1011 = vlaneseq
    %v1012 = vshrl.u32 %v1011, 7
    %v1013 = vsub.s32 1, %v1012
    %v1014 = vrot.slane %v923, %v1013
    %v1015 = vlaneseq
    %v1016 = vshrl.u32 %v1015, 7
    %v1017 = vsub.s32 1, %v1016
    %v1018 = vrot.slane %v924, %v1017
    %v1019 = vlaneseq
    %v1020 = vshrl.u32 %v1019, 7
    %v1021 = vsub.s32 1, %v1020
    %v1022 = vrot.slane %v925, %v1021
    %v1023 = vlaneseq
    %v1024 = vshrl.u32 %v1023, 7
    %v1025 = vsub.s32 1, %v1024
    %v1026 = vrot.slane %v926, %v1025
    %v1027 = vlaneseq
    %v1028 = vshrl.u32 %v1027, 7
    %v1029 = vsub.s32 1, %v1028
    %v1030 = vrot.slane %v927, %v1029
    %v1031 = vrot.slane %v920, 1
    %v1032 = vsel %vm108, %v921, %v1031
    %v1033 = vrot.slane %v922, 7
    %v1034 = vsel %vm111, %v1033, %v1032
    %v1035 = vrot.slane %v923, 6
    %v1036 = vsel %vm114, %v1035, %v1034
    %v1037 = vrot.slane %v924, 5
    %v1038 = vsel %vm117, %v1037, %v1036
    %v1039 = vrot.slane %v925, 4
    %v1040 = vsel %vm120, %v1039, %v1038
    %v1041 = vrot.slane %v926, 3
    %v1042 = vsel %vm123, %v1041, %v1040
    %v1043 = vrot.slane %v927, 2
    %v1044 = vsel %vm126, %v1043, %v1042
    %v1046 = vsub.f32 %v1002, %v1044
    %v1047 = vsub.f32 %v1006, %v1044
    %v1048 = vsub.f32 %v1010, %v1044
    %v1049 = vsub.f32 %v1014, %v1044
    %v1050 = vsub.f32 %v1018, %v1044
    %v1051 = vsub.f32 %v1022, %v1044
    %v1052 = vsub.f32 %v1026, %v1044
    %v1053 = vsub.f32 %v1030, %v1044
    %v1054 = vmul.f32 %v1046, %v1046
    %v1055 = vmul.f32 %v1047, %v1047
    %v1056 = vmul.f32 %v1048, %v1048
    %v1057 = vmul.f32 %v1049, %v1049
    %v1058 = vmul.f32 %v1050, %v1050
    %v1059 = vmul.f32 %v1051, %v1051
    %v1060 = vmul.f32 %v1052, %v1052
    %v1061 = vmul.f32 %v1053, %v1053
    %v1062 = vadd.f32 %v991, %v1054
    %v1063 = vadd.f32 %v992, %v1055
    %v1064 = vadd.f32 %v993, %v1056
    %v1065 = vadd.f32 %v994, %v1057
    %v1066 = vadd.f32 %v995, %v1058
    %v1067 = vadd.f32 %v996, %v1059
    %v1068 = vadd.f32 %v997, %v1060
    %v1069 = vadd.f32 %v998, %v1061
    %v1070 = vrsqrt.pop %v1062
    %v1071 = vmul.f32 %v1062, %v1070
    %vm1072 = vcmp.eq.f32.partialorder %v1062, inf
    %v1073 = vsel %vm1072, %v1062, %v1071
    %vm1074 = vcmp.eq.f32.partialorder %v1062, 0.0
    %v1075 = vand.u32 %v1062, 2147483648
    %v1076 = vsel %vm1074, %v1075, %v1073
    %v1077 = vrsqrt.pop %v1063
    %v1078 = vmul.f32 %v1063, %v1077
    %vm1079 = vcmp.eq.f32.partialorder %v1063, inf
    %v1080 = vsel %vm1079, %v1063, %v1078
    %vm1081 = vcmp.eq.f32.partialorder %v1063, 0.0
    %v1082 = vand.u32 %v1063, 2147483648
    %v1083 = vsel %vm1081, %v1082, %v1080
    %v1084 = vrsqrt.pop %v1064
    %v1085 = vmul.f32 %v1064, %v1084
    %vm1086 = vcmp.eq.f32.partialorder %v1064, inf
    %v1087 = vsel %vm1086, %v1064, %v1085
    %vm1088 = vcmp.eq.f32.partialorder %v1064, 0.0
    %v1089 = vand.u32 %v1064, 2147483648
    %v1090 = vsel %vm1088, %v1089, %v1087
    %v1091 = vrsqrt.pop %v1065
    %v1092 = vmul.f32 %v1065, %v1091
    %vm1093 = vcmp.eq.f32.partialorder %v1065, inf
    %v1094 = vsel %vm1093, %v1065, %v1092
    %vm1095 = vcmp.eq.f32.partialorder %v1065, 0.0
    %v1096 = vand.u32 %v1065, 2147483648
    %v1097 = vsel %vm1095, %v1096, %v1094
    %v1098 = vrsqrt.pop %v1066
    %v1099 = vmul.f32 %v1066, %v1098
    %vm1100 = vcmp.eq.f32.partialorder %v1066, inf
    %v1101 = vsel %vm1100, %v1066, %v1099
    %vm1102 = vcmp.eq.f32.partialorder %v1066, 0.0
    %v1103 = vand.u32 %v1066, 2147483648
    %v1104 = vsel %vm1102, %v1103, %v1101
    %v1105 = vrsqrt.pop %v1067
    %v1106 = vmul.f32 %v1067, %v1105
    %vm1107 = vcmp.eq.f32.partialorder %v1067, inf
    %v1108 = vsel %vm1107, %v1067, %v1106
    %vm1109 = vcmp.eq.f32.partialorder %v1067, 0.0
    %v1110 = vand.u32 %v1067, 2147483648
    %v1111 = vsel %vm1109, %v1110, %v1108
    %v1112 = vrsqrt.pop %v1068
    %v1113 = vmul.f32 %v1068, %v1112
    %vm1114 = vcmp.eq.f32.partialorder %v1068, inf
    %v1115 = vsel %vm1114, %v1068, %v1113
    %vm1116 = vcmp.eq.f32.partialorder %v1068, 0.0
    %v1117 = vand.u32 %v1068, 2147483648
    %v1118 = vsel %vm1116, %v1117, %v1115
    %v1119 = vrsqrt.pop %v1069
    %v1120 = vmul.f32 %v1069, %v1119
    %vm1121 = vcmp.eq.f32.partialorder %v1069, inf
    %v1122 = vsel %vm1121, %v1069, %v1120
    %vm1123 = vcmp.eq.f32.partialorder %v1069, 0.0
    %v1124 = vand.u32 %v1069, 2147483648
    %v1125 = vsel %vm1123, %v1124, %v1122
    %v1126 = vmul.f32 %v1076, -0.5
    %v1127 = vmul.f32 %v1083, -0.5
    %v1128 = vmul.f32 %v1090, -0.5
    %v1129 = vmul.f32 %v1097, -0.5
    %v1130 = vmul.f32 %v1104, -0.5
    %v1131 = vmul.f32 %v1111, -0.5
    %v1132 = vmul.f32 %v1118, -0.5
    %v1133 = vmul.f32 %v1125, -0.5
    %v1134 = vmul.f32 %v1126, 1.442695
    %v1135 = vpow.pop %v1134
    %v1136 = vmul.f32 %v1127, 1.442695
    %v1137 = vpow.pop %v1136
    %v1138 = vmul.f32 %v1128, 1.442695
    %v1139 = vpow.pop %v1138
    %v1140 = vmul.f32 %v1129, 1.442695
    %v1141 = vpow.pop %v1140
    %v1142 = vmul.f32 %v1130, 1.442695
    %v1143 = vpow.pop %v1142
    %v1144 = vmul.f32 %v1131, 1.442695
    %v1145 = vpow.pop %v1144
    %v1146 = vmul.f32 %v1132, 1.442695
    %v1147 = vpow.pop %v1146
    %v1148 = vmul.f32 %v1133, 1.442695
    %v1149 = vpow.pop %v1148
    %v1150 = vadd.f32 %v1135, %v49
    %v1151 = vadd.f32 %v1137, %v50
    %v1152 = vadd.f32 %v1139, %v51
    %v1153 = vadd.f32 %v1141, %v52
    %v1154 = vadd.f32 %v1143, %v53
    %v1155 = vadd.f32 %v1145, %v54
    %v1156 = vadd.f32 %v1147, %v55
    %v1157 = vadd.f32 %v1149, %v56
    %v1158 = vrcp.pop %v1150
    %v1159 = vlaneseq
    %v1160 = vshrl.u32 %v1159, 7
    %v1161 = vsub.s32 0, %v1160
    %v1162 = vrot.slane %v1158, %v1161
    %v1163 = vmul.f32 %v41, %v1162
    %v1164 = vsub.f32 %v1150, %v57
    %v1165 = vsub.f32 %v1151, %v58
    %v1166 = vsub.f32 %v1152, %v58
    %v1167 = vsub.f32 %v1153, %v58
    %v1168 = vsub.f32 %v1154, %v58
    %v1169 = vsub.f32 %v1155, %v58
    %v1170 = vsub.f32 %v1156, %v58
    %v1171 = vsub.f32 %v1157, %v58
    %v1172 = vlaneseq
    %v1173 = vshrl.u32 %v1172, 7
    %v1174 = vsub.s32 0, %v1173
    %v1175 = vrot.slane %v1164, %v1174
    %v1176 = vlaneseq
    %v1177 = vshrl.u32 %v1176, 7
    %v1178 = vsub.s32 0, %v1177
    %v1179 = vrot.slane %v1165, %v1178
    %v1180 = vlaneseq
    %v1181 = vshrl.u32 %v1180, 7
    %v1182 = vsub.s32 0, %v1181
    %v1183 = vrot.slane %v1166, %v1182
    %v1184 = vlaneseq
    %v1185 = vshrl.u32 %v1184, 7
    %v1186 = vsub.s32 0, %v1185
    %v1187 = vrot.slane %v1167, %v1186
    %v1188 = vlaneseq
    %v1189 = vshrl.u32 %v1188, 7
    %v1190 = vsub.s32 0, %v1189
    %v1191 = vrot.slane %v1168, %v1190
    %v1192 = vlaneseq
    %v1193 = vshrl.u32 %v1192, 7
    %v1194 = vsub.s32 0, %v1193
    %v1195 = vrot.slane %v1169, %v1194
    %v1196 = vlaneseq
    %v1197 = vshrl.u32 %v1196, 7
    %v1198 = vsub.s32 0, %v1197
    %v1199 = vrot.slane %v1170, %v1198
    %v1200 = vlaneseq
    %v1201 = vshrl.u32 %v1200, 7
    %v1202 = vsub.s32 0, %v1201
    %v1203 = vrot.slane %v1171, %v1202
    %v1204 = vmul.f32 %v1175, %v1163
    %v1205 = vmul.f32 %v1179, %v1163
    %v1206 = vmul.f32 %v1183, %v1163
    %v1207 = vmul.f32 %v1187, %v1163
    %v1208 = vmul.f32 %v1191, %v1163
    %v1209 = vmul.f32 %v1195, %v1163
    %v1210 = vmul.f32 %v1199, %v1163
    %v1211 = vmul.f32 %v1203, %v1163
    %v1212 = vsub.f32 %v41, %v1204
    %v1213 = vsub.f32 %v42, %v1205
    %v1214 = vsub.f32 %v43, %v1206
    %v1215 = vsub.f32 %v44, %v1207
    %v1216 = vsub.f32 %v45, %v1208
    %v1217 = vsub.f32 %v46, %v1209
    %v1218 = vsub.f32 %v47, %v1210
    %v1219 = vsub.f32 %v48, %v1211
    %v1220 = vmul.f32 %v1150, %v1162
    %v1221 = vmul.f32 %v1175, %v1220
    %v1222 = vmul.f32 %v1179, %v1220
    %v1223 = vmul.f32 %v1183, %v1220
    %v1224 = vmul.f32 %v1187, %v1220
    %v1225 = vmul.f32 %v1191, %v1220
    %v1226 = vmul.f32 %v1195, %v1220
    %v1227 = vmul.f32 %v1199, %v1220
    %v1228 = vmul.f32 %v1203, %v1220
    %v1229 = vsub.f32 %v1150, %v1221
    %v1230 = vsub.f32 %v1151, %v1222
    %v1231 = vsub.f32 %v1152, %v1223
    %v1232 = vsub.f32 %v1153, %v1224
    %v1233 = vsub.f32 %v1154, %v1225
    %v1234 = vsub.f32 %v1155, %v1226
    %v1235 = vsub.f32 %v1156, %v1227
    %v1236 = vsub.f32 %v1157, %v1228
    %v1237 = vrcp.pop %v1230
    %v1238 = vlaneseq
    %v1239 = vshrl.u32 %v1238, 7
    %v1240 = vsub.s32 1, %v1239
    %v1241 = vrot.slane %v1237, %v1240
    %v1242 = vmul.f32 %v1213, %v1241
    %v1243 = vsub.f32 %v1229, %v58
    %v1244 = vsub.f32 %v1230, %v57
    %v1245 = vsub.f32 %v1231, %v58
    %v1246 = vsub.f32 %v1232, %v58
    %v1247 = vsub.f32 %v1233, %v58
    %v1248 = vsub.f32 %v1234, %v58
    %v1249 = vsub.f32 %v1235, %v58
    %v1250 = vsub.f32 %v1236, %v58
    %v1251 = vlaneseq
    %v1252 = vshrl.u32 %v1251, 7
    %v1253 = vsub.s32 1, %v1252
    %v1254 = vrot.slane %v1243, %v1253
    %v1255 = vlaneseq
    %v1256 = vshrl.u32 %v1255, 7
    %v1257 = vsub.s32 1, %v1256
    %v1258 = vrot.slane %v1244, %v1257
    %v1259 = vlaneseq
    %v1260 = vshrl.u32 %v1259, 7
    %v1261 = vsub.s32 1, %v1260
    %v1262 = vrot.slane %v1245, %v1261
    %v1263 = vlaneseq
    %v1264 = vshrl.u32 %v1263, 7
    %v1265 = vsub.s32 1, %v1264
    %v1266 = vrot.slane %v1246, %v1265
    %v1267 = vlaneseq
    %v1268 = vshrl.u32 %v1267, 7
    %v1269 = vsub.s32 1, %v1268
    %v1270 = vrot.slane %v1247, %v1269
    %v1271 = vlaneseq
    %v1272 = vshrl.u32 %v1271, 7
    %v1273 = vsub.s32 1, %v1272
    %v1274 = vrot.slane %v1248, %v1273
    %v1275 = vlaneseq
    %v1276 = vshrl.u32 %v1275, 7
    %v1277 = vsub.s32 1, %v1276
    %v1278 = vrot.slane %v1249, %v1277
    %v1279 = vlaneseq
    %v1280 = vshrl.u32 %v1279, 7
    %v1281 = vsub.s32 1, %v1280
    %v1282 = vrot.slane %v1250, %v1281
    %v1283 = vmul.f32 %v1254, %v1242
    %v1284 = vmul.f32 %v1258, %v1242
    %v1285 = vmul.f32 %v1262, %v1242
    %v1286 = vmul.f32 %v1266, %v1242
    %v1287 = vmul.f32 %v1270, %v1242
    %v1288 = vmul.f32 %v1274, %v1242
    %v1289 = vmul.f32 %v1278, %v1242
    %v1290 = vmul.f32 %v1282, %v1242
    %v1291 = vsub.f32 %v1212, %v1283
    %v1292 = vsub.f32 %v1213, %v1284
    %v1293 = vsub.f32 %v1214, %v1285
    %v1294 = vsub.f32 %v1215, %v1286
    %v1295 = vsub.f32 %v1216, %v1287
    %v1296 = vsub.f32 %v1217, %v1288
    %v1297 = vsub.f32 %v1218, %v1289
    %v1298 = vsub.f32 %v1219, %v1290
    %v1299 = vmul.f32 %v1230, %v1241
    %v1300 = vmul.f32 %v1254, %v1299
    %v1301 = vmul.f32 %v1258, %v1299
    %v1302 = vmul.f32 %v1262, %v1299
    %v1303 = vmul.f32 %v1266, %v1299
    %v1304 = vmul.f32 %v1270, %v1299
    %v1305 = vmul.f32 %v1274, %v1299
    %v1306 = vmul.f32 %v1278, %v1299
    %v1307 = vmul.f32 %v1282, %v1299
    %v1308 = vsub.f32 %v1229, %v1300
    %v1309 = vsub.f32 %v1230, %v1301
    %v1310 = vsub.f32 %v1231, %v1302
    %v1311 = vsub.f32 %v1232, %v1303
    %v1312 = vsub.f32 %v1233, %v1304
    %v1313 = vsub.f32 %v1234, %v1305
    %v1314 = vsub.f32 %v1235, %v1306
    %v1315 = vsub.f32 %v1236, %v1307
    %v1316 = vrcp.pop %v1310
    %v1317 = vlaneseq
    %v1318 = vshrl.u32 %v1317, 7
    %v1319 = vsub.s32 2, %v1318
    %v1320 = vrot.slane %v1316, %v1319
    %v1321 = vmul.f32 %v1293, %v1320
    %v1322 = vsub.f32 %v1308, %v58
    %v1323 = vsub.f32 %v1309, %v58
    %v1324 = vsub.f32 %v1310, %v57
    %v1325 = vsub.f32 %v1311, %v58
    %v1326 = vsub.f32 %v1312, %v58
    %v1327 = vsub.f32 %v1313, %v58
    %v1328 = vsub.f32 %v1314, %v58
    %v1329 = vsub.f32 %v1315, %v58
    %v1330 = vlaneseq
    %v1331 = vshrl.u32 %v1330, 7
    %v1332 = vsub.s32 2, %v1331
    %v1333 = vrot.slane %v1322, %v1332
    %v1334 = vlaneseq
    %v1335 = vshrl.u32 %v1334, 7
    %v1336 = vsub.s32 2, %v1335
    %v1337 = vrot.slane %v1323, %v1336
    %v1338 = vlaneseq
    %v1339 = vshrl.u32 %v1338, 7
    %v1340 = vsub.s32 2, %v1339
    %v1341 = vrot.slane %v1324, %v1340
    %v1342 = vlaneseq
    %v1343 = vshrl.u32 %v1342, 7
    %v1344 = vsub.s32 2, %v1343
    %v1345 = vrot.slane %v1325, %v1344
    %v1346 = vlaneseq
    %v1347 = vshrl.u32 %v1346, 7
    %v1348 = vsub.s32 2, %v1347
    %v1349 = vrot.slane %v1326, %v1348
    %v1350 = vlaneseq
    %v1351 = vshrl.u32 %v1350, 7
    %v1352 = vsub.s32 2, %v1351
    %v1353 = vrot.slane %v1327, %v1352
    %v1354 = vlaneseq
    %v1355 = vshrl.u32 %v1354, 7
    %v1356 = vsub.s32 2, %v1355
    %v1357 = vrot.slane %v1328, %v1356
    %v1358 = vlaneseq
    %v1359 = vshrl.u32 %v1358, 7
    %v1360 = vsub.s32 2, %v1359
    %v1361 = vrot.slane %v1329, %v1360
    %v1362 = vmul.f32 %v1333, %v1321
    %v1363 = vmul.f32 %v1337, %v1321
    %v1364 = vmul.f32 %v1341, %v1321
    %v1365 = vmul.f32 %v1345, %v1321
    %v1366 = vmul.f32 %v1349, %v1321
    %v1367 = vmul.f32 %v1353, %v1321
    %v1368 = vmul.f32 %v1357, %v1321
    %v1369 = vmul.f32 %v1361, %v1321
    %v1370 = vsub.f32 %v1291, %v1362
    %v1371 = vsub.f32 %v1292, %v1363
    %v1372 = vsub.f32 %v1293, %v1364
    %v1373 = vsub.f32 %v1294, %v1365
    %v1374 = vsub.f32 %v1295, %v1366
    %v1375 = vsub.f32 %v1296, %v1367
    %v1376 = vsub.f32 %v1297, %v1368
    %v1377 = vsub.f32 %v1298, %v1369
    %v1378 = vmul.f32 %v1310, %v1320
    %v1379 = vmul.f32 %v1333, %v1378
    %v1380 = vmul.f32 %v1337, %v1378
    %v1381 = vmul.f32 %v1341, %v1378
    %v1382 = vmul.f32 %v1345, %v1378
    %v1383 = vmul.f32 %v1349, %v1378
    %v1384 = vmul.f32 %v1353, %v1378
    %v1385 = vmul.f32 %v1357, %v1378
    %v1386 = vmul.f32 %v1361, %v1378
    %v1387 = vsub.f32 %v1308, %v1379
    %v1388 = vsub.f32 %v1309, %v1380
    %v1389 = vsub.f32 %v1310, %v1381
    %v1390 = vsub.f32 %v1311, %v1382
    %v1391 = vsub.f32 %v1312, %v1383
    %v1392 = vsub.f32 %v1313, %v1384
    %v1393 = vsub.f32 %v1314, %v1385
    %v1394 = vsub.f32 %v1315, %v1386
    %v1395 = vrcp.pop %v1390
    %v1396 = vlaneseq
    %v1397 = vshrl.u32 %v1396, 7
    %v1398 = vsub.s32 3, %v1397
    %v1399 = vrot.slane %v1395, %v1398
    %v1400 = vmul.f32 %v1373, %v1399
    %v1401 = vsub.f32 %v1387, %v58
    %v1402 = vsub.f32 %v1388, %v58
    %v1403 = vsub.f32 %v1389, %v58
    %v1404 = vsub.f32 %v1390, %v57
    %v1405 = vsub.f32 %v1391, %v58
    %v1406 = vsub.f32 %v1392, %v58
    %v1407 = vsub.f32 %v1393, %v58
    %v1408 = vsub.f32 %v1394, %v58
    %v1409 = vlaneseq
    %v1410 = vshrl.u32 %v1409, 7
    %v1411 = vsub.s32 3, %v1410
    %v1412 = vrot.slane %v1401, %v1411
    %v1413 = vlaneseq
    %v1414 = vshrl.u32 %v1413, 7
    %v1415 = vsub.s32 3, %v1414
    %v1416 = vrot.slane %v1402, %v1415
    %v1417 = vlaneseq
    %v1418 = vshrl.u32 %v1417, 7
    %v1419 = vsub.s32 3, %v1418
    %v1420 = vrot.slane %v1403, %v1419
    %v1421 = vlaneseq
    %v1422 = vshrl.u32 %v1421, 7
    %v1423 = vsub.s32 3, %v1422
    %v1424 = vrot.slane %v1404, %v1423
    %v1425 = vlaneseq
    %v1426 = vshrl.u32 %v1425, 7
    %v1427 = vsub.s32 3, %v1426
    %v1428 = vrot.slane %v1405, %v1427
    %v1429 = vlaneseq
    %v1430 = vshrl.u32 %v1429, 7
    %v1431 = vsub.s32 3, %v1430
    %v1432 = vrot.slane %v1406, %v1431
    %v1433 = vlaneseq
    %v1434 = vshrl.u32 %v1433, 7
    %v1435 = vsub.s32 3, %v1434
    %v1436 = vrot.slane %v1407, %v1435
    %v1437 = vlaneseq
    %v1438 = vshrl.u32 %v1437, 7
    %v1439 = vsub.s32 3, %v1438
    %v1440 = vrot.slane %v1408, %v1439
    %v1441 = vmul.f32 %v1412, %v1400
    %v1442 = vmul.f32 %v1416, %v1400
    %v1443 = vmul.f32 %v1420, %v1400
    %v1444 = vmul.f32 %v1424, %v1400
    %v1445 = vmul.f32 %v1428, %v1400
    %v1446 = vmul.f32 %v1432, %v1400
    %v1447 = vmul.f32 %v1436, %v1400
    %v1448 = vmul.f32 %v1440, %v1400
    %v1449 = vsub.f32 %v1370, %v1441
    %v1450 = vsub.f32 %v1371, %v1442
    %v1451 = vsub.f32 %v1372, %v1443
    %v1452 = vsub.f32 %v1373, %v1444
    %v1453 = vsub.f32 %v1374, %v1445
    %v1454 = vsub.f32 %v1375, %v1446
    %v1455 = vsub.f32 %v1376, %v1447
    %v1456 = vsub.f32 %v1377, %v1448
    %v1457 = vmul.f32 %v1390, %v1399
    %v1458 = vmul.f32 %v1412, %v1457
    %v1459 = vmul.f32 %v1416, %v1457
    %v1460 = vmul.f32 %v1420, %v1457
    %v1461 = vmul.f32 %v1424, %v1457
    %v1462 = vmul.f32 %v1428, %v1457
    %v1463 = vmul.f32 %v1432, %v1457
    %v1464 = vmul.f32 %v1436, %v1457
    %v1465 = vmul.f32 %v1440, %v1457
    %v1466 = vsub.f32 %v1387, %v1458
    %v1467 = vsub.f32 %v1388, %v1459
    %v1468 = vsub.f32 %v1389, %v1460
    %v1469 = vsub.f32 %v1390, %v1461
    %v1470 = vsub.f32 %v1391, %v1462
    %v1471 = vsub.f32 %v1392, %v1463
    %v1472 = vsub.f32 %v1393, %v1464
    %v1473 = vsub.f32 %v1394, %v1465
    %v1474 = vrcp.pop %v1470
    %v1475 = vlaneseq
    %v1476 = vshrl.u32 %v1475, 7
    %v1477 = vsub.s32 4, %v1476
    %v1478 = vrot.slane %v1474, %v1477
    %v1479 = vmul.f32 %v1453, %v1478
    %v1480 = vsub.f32 %v1466, %v58
    %v1481 = vsub.f32 %v1467, %v58
    %v1482 = vsub.f32 %v1468, %v58
    %v1483 = vsub.f32 %v1469, %v58
    %v1484 = vsub.f32 %v1470, %v57
    %v1485 = vsub.f32 %v1471, %v58
    %v1486 = vsub.f32 %v1472, %v58
    %v1487 = vsub.f32 %v1473, %v58
    %v1488 = vlaneseq
    %v1489 = vshrl.u32 %v1488, 7
    %v1490 = vsub.s32 4, %v1489
    %v1491 = vrot.slane %v1480, %v1490
    %v1492 = vlaneseq
    %v1493 = vshrl.u32 %v1492, 7
    %v1494 = vsub.s32 4, %v1493
    %v1495 = vrot.slane %v1481, %v1494
    %v1496 = vlaneseq
    %v1497 = vshrl.u32 %v1496, 7
    %v1498 = vsub.s32 4, %v1497
    %v1499 = vrot.slane %v1482, %v1498
    %v1500 = vlaneseq
    %v1501 = vshrl.u32 %v1500, 7
    %v1502 = vsub.s32 4, %v1501
    %v1503 = vrot.slane %v1483, %v1502
    %v1504 = vlaneseq
    %v1505 = vshrl.u32 %v1504, 7
    %v1506 = vsub.s32 4, %v1505
    %v1507 = vrot.slane %v1484, %v1506
    %v1508 = vlaneseq
    %v1509 = vshrl.u32 %v1508, 7
    %v1510 = vsub.s32 4, %v1509
    %v1511 = vrot.slane %v1485, %v1510
    %v1512 = vlaneseq
    %v1513 = vshrl.u32 %v1512, 7
    %v1514 = vsub.s32 4, %v1513
    %v1515 = vrot.slane %v1486, %v1514
    %v1516 = vlaneseq
    %v1517 = vshrl.u32 %v1516, 7
    %v1518 = vsub.s32 4, %v1517
    %v1519 = vrot.slane %v1487, %v1518
    %v1520 = vmul.f32 %v1491, %v1479
    %v1521 = vmul.f32 %v1495, %v1479
    %v1522 = vmul.f32 %v1499, %v1479
    %v1523 = vmul.f32 %v1503, %v1479
    %v1524 = vmul.f32 %v1507, %v1479
    %v1525 = vmul.f32 %v1511, %v1479
    %v1526 = vmul.f32 %v1515, %v1479
    %v1527 = vmul.f32 %v1519, %v1479
    %v1528 = vsub.f32 %v1449, %v1520
    %v1529 = vsub.f32 %v1450, %v1521
    %v1530 = vsub.f32 %v1451, %v1522
    %v1531 = vsub.f32 %v1452, %v1523
    %v1532 = vsub.f32 %v1453, %v1524
    %v1533 = vsub.f32 %v1454, %v1525
    %v1534 = vsub.f32 %v1455, %v1526
    %v1535 = vsub.f32 %v1456, %v1527
    %v1536 = vmul.f32 %v1470, %v1478
    %v1537 = vmul.f32 %v1491, %v1536
    %v1538 = vmul.f32 %v1495, %v1536
    %v1539 = vmul.f32 %v1499, %v1536
    %v1540 = vmul.f32 %v1503, %v1536
    %v1541 = vmul.f32 %v1507, %v1536
    %v1542 = vmul.f32 %v1511, %v1536
    %v1543 = vmul.f32 %v1515, %v1536
    %v1544 = vmul.f32 %v1519, %v1536
    %v1545 = vsub.f32 %v1466, %v1537
    %v1546 = vsub.f32 %v1467, %v1538
    %v1547 = vsub.f32 %v1468, %v1539
    %v1548 = vsub.f32 %v1469, %v1540
    %v1549 = vsub.f32 %v1470, %v1541
    %v1550 = vsub.f32 %v1471, %v1542
    %v1551 = vsub.f32 %v1472, %v1543
    %v1552 = vsub.f32 %v1473, %v1544
    %v1553 = vrcp.pop %v1550
    %v1554 = vlaneseq
    %v1555 = vshrl.u32 %v1554, 7
    %v1556 = vsub.s32 5, %v1555
    %v1557 = vrot.slane %v1553, %v1556
    %v1558 = vmul.f32 %v1533, %v1557
    %v1559 = vsub.f32 %v1545, %v58
    %v1560 = vsub.f32 %v1546, %v58
    %v1561 = vsub.f32 %v1547, %v58
    %v1562 = vsub.f32 %v1548, %v58
    %v1563 = vsub.f32 %v1549, %v58
    %v1564 = vsub.f32 %v1550, %v57
    %v1565 = vsub.f32 %v1551, %v58
    %v1566 = vsub.f32 %v1552, %v58
    %v1567 = vlaneseq
    %v1568 = vshrl.u32 %v1567, 7
    %v1569 = vsub.s32 5, %v1568
    %v1570 = vrot.slane %v1559, %v1569
    %v1571 = vlaneseq
    %v1572 = vshrl.u32 %v1571, 7
    %v1573 = vsub.s32 5, %v1572
    %v1574 = vrot.slane %v1560, %v1573
    %v1575 = vlaneseq
    %v1576 = vshrl.u32 %v1575, 7
    %v1577 = vsub.s32 5, %v1576
    %v1578 = vrot.slane %v1561, %v1577
    %v1579 = vlaneseq
    %v1580 = vshrl.u32 %v1579, 7
    %v1581 = vsub.s32 5, %v1580
    %v1582 = vrot.slane %v1562, %v1581
    %v1583 = vlaneseq
    %v1584 = vshrl.u32 %v1583, 7
    %v1585 = vsub.s32 5, %v1584
    %v1586 = vrot.slane %v1563, %v1585
    %v1587 = vlaneseq
    %v1588 = vshrl.u32 %v1587, 7
    %v1589 = vsub.s32 5, %v1588
    %v1590 = vrot.slane %v1564, %v1589
    %v1591 = vlaneseq
    %v1592 = vshrl.u32 %v1591, 7
    %v1593 = vsub.s32 5, %v1592
    %v1594 = vrot.slane %v1565, %v1593
    %v1595 = vlaneseq
    %v1596 = vshrl.u32 %v1595, 7
    %v1597 = vsub.s32 5, %v1596
    %v1598 = vrot.slane %v1566, %v1597
    %v1599 = vmul.f32 %v1570, %v1558
    %v1600 = vmul.f32 %v1574, %v1558
    %v1601 = vmul.f32 %v1578, %v1558
    %v1602 = vmul.f32 %v1582, %v1558
    %v1603 = vmul.f32 %v1586, %v1558
    %v1604 = vmul.f32 %v1590, %v1558
    %v1605 = vmul.f32 %v1594, %v1558
    %v1606 = vmul.f32 %v1598, %v1558
    %v1607 = vsub.f32 %v1528, %v1599
    %v1608 = vsub.f32 %v1529, %v1600
    %v1609 = vsub.f32 %v1530, %v1601
    %v1610 = vsub.f32 %v1531, %v1602
    %v1611 = vsub.f32 %v1532, %v1603
    %v1612 = vsub.f32 %v1533, %v1604
    %v1613 = vsub.f32 %v1534, %v1605
    %v1614 = vsub.f32 %v1535, %v1606
    %v1615 = vmul.f32 %v1550, %v1557
    %v1616 = vmul.f32 %v1570, %v1615
    %v1617 = vmul.f32 %v1574, %v1615
    %v1618 = vmul.f32 %v1578, %v1615
    %v1619 = vmul.f32 %v1582, %v1615
    %v1620 = vmul.f32 %v1586, %v1615
    %v1621 = vmul.f32 %v1590, %v1615
    %v1622 = vmul.f32 %v1594, %v1615
    %v1623 = vmul.f32 %v1598, %v1615
    %v1624 = vsub.f32 %v1545, %v1616
    %v1625 = vsub.f32 %v1546, %v1617
    %v1626 = vsub.f32 %v1547, %v1618
    %v1627 = vsub.f32 %v1548, %v1619
    %v1628 = vsub.f32 %v1549, %v1620
    %v1629 = vsub.f32 %v1550, %v1621
    %v1630 = vsub.f32 %v1551, %v1622
    %v1631 = vsub.f32 %v1552, %v1623
    %v1632 = vrcp.pop %v1630
    %v1633 = vlaneseq
    %v1634 = vshrl.u32 %v1633, 7
    %v1635 = vsub.s32 6, %v1634
    %v1636 = vrot.slane %v1632, %v1635
    %v1637 = vmul.f32 %v1613, %v1636
    %v1638 = vsub.f32 %v1624, %v58
    %v1639 = vsub.f32 %v1625, %v58
    %v1640 = vsub.f32 %v1626, %v58
    %v1641 = vsub.f32 %v1627, %v58
    %v1642 = vsub.f32 %v1628, %v58
    %v1643 = vsub.f32 %v1629, %v58
    %v1644 = vsub.f32 %v1630, %v57
    %v1645 = vsub.f32 %v1631, %v58
    %v1646 = vlaneseq
    %v1647 = vshrl.u32 %v1646, 7
    %v1648 = vsub.s32 6, %v1647
    %v1649 = vrot.slane %v1638, %v1648
    %v1650 = vlaneseq
    %v1651 = vshrl.u32 %v1650, 7
    %v1652 = vsub.s32 6, %v1651
    %v1653 = vrot.slane %v1639, %v1652
    %v1654 = vlaneseq
    %v1655 = vshrl.u32 %v1654, 7
    %v1656 = vsub.s32 6, %v1655
    %v1657 = vrot.slane %v1640, %v1656
    %v1658 = vlaneseq
    %v1659 = vshrl.u32 %v1658, 7
    %v1660 = vsub.s32 6, %v1659
    %v1661 = vrot.slane %v1641, %v1660
    %v1662 = vlaneseq
    %v1663 = vshrl.u32 %v1662, 7
    %v1664 = vsub.s32 6, %v1663
    %v1665 = vrot.slane %v1642, %v1664
    %v1666 = vlaneseq
    %v1667 = vshrl.u32 %v1666, 7
    %v1668 = vsub.s32 6, %v1667
    %v1669 = vrot.slane %v1643, %v1668
    %v1670 = vlaneseq
    %v1671 = vshrl.u32 %v1670, 7
    %v1672 = vsub.s32 6, %v1671
    %v1673 = vrot.slane %v1644, %v1672
    %v1674 = vlaneseq
    %v1675 = vshrl.u32 %v1674, 7
    %v1676 = vsub.s32 6, %v1675
    %v1677 = vrot.slane %v1645, %v1676
    %v1678 = vmul.f32 %v1649, %v1637
    %v1679 = vmul.f32 %v1653, %v1637
    %v1680 = vmul.f32 %v1657, %v1637
    %v1681 = vmul.f32 %v1661, %v1637
    %v1682 = vmul.f32 %v1665, %v1637
    %v1683 = vmul.f32 %v1669, %v1637
    %v1684 = vmul.f32 %v1673, %v1637
    %v1685 = vmul.f32 %v1677, %v1637
    %v1686 = vsub.f32 %v1607, %v1678
    %v1687 = vsub.f32 %v1608, %v1679
    %v1688 = vsub.f32 %v1609, %v1680
    %v1689 = vsub.f32 %v1610, %v1681
    %v1690 = vsub.f32 %v1611, %v1682
    %v1691 = vsub.f32 %v1612, %v1683
    %v1692 = vsub.f32 %v1613, %v1684
    %v1693 = vsub.f32 %v1614, %v1685
    %v1694 = vmul.f32 %v1630, %v1636
    %v1695 = vmul.f32 %v1649, %v1694
    %v1696 = vmul.f32 %v1653, %v1694
    %v1697 = vmul.f32 %v1657, %v1694
    %v1698 = vmul.f32 %v1661, %v1694
    %v1699 = vmul.f32 %v1665, %v1694
    %v1700 = vmul.f32 %v1669, %v1694
    %v1701 = vmul.f32 %v1673, %v1694
    %v1702 = vmul.f32 %v1677, %v1694
    %v1703 = vsub.f32 %v1624, %v1695
    %v1704 = vsub.f32 %v1625, %v1696
    %v1705 = vsub.f32 %v1626, %v1697
    %v1706 = vsub.f32 %v1627, %v1698
    %v1707 = vsub.f32 %v1628, %v1699
    %v1708 = vsub.f32 %v1629, %v1700
    %v1709 = vsub.f32 %v1630, %v1701
    %v1710 = vsub.f32 %v1631, %v1702
    %v1711 = vrcp.pop %v1710
    %v1712 = vlaneseq
    %v1713 = vshrl.u32 %v1712, 7
    %v1714 = vsub.s32 7, %v1713
    %v1715 = vrot.slane %v1711, %v1714
    %v1716 = vmul.f32 %v1693, %v1715
    %v1717 = vsub.f32 %v1703, %v58
    %v1718 = vsub.f32 %v1704, %v58
    %v1719 = vsub.f32 %v1705, %v58
    %v1720 = vsub.f32 %v1706, %v58
    %v1721 = vsub.f32 %v1707, %v58
    %v1722 = vsub.f32 %v1708, %v58
    %v1723 = vsub.f32 %v1709, %v58
    %v1724 = vsub.f32 %v1710, %v57
    %v1725 = vlaneseq
    %v1726 = vshrl.u32 %v1725, 7
    %v1727 = vsub.s32 7, %v1726
    %v1728 = vrot.slane %v1717, %v1727
    %v1729 = vlaneseq
    %v1730 = vshrl.u32 %v1729, 7
    %v1731 = vsub.s32 7, %v1730
    %v1732 = vrot.slane %v1718, %v1731
    %v1733 = vlaneseq
    %v1734 = vshrl.u32 %v1733, 7
    %v1735 = vsub.s32 7, %v1734
    %v1736 = vrot.slane %v1719, %v1735
    %v1737 = vlaneseq
    %v1738 = vshrl.u32 %v1737, 7
    %v1739 = vsub.s32 7, %v1738
    %v1740 = vrot.slane %v1720, %v1739
    %v1741 = vlaneseq
    %v1742 = vshrl.u32 %v1741, 7
    %v1743 = vsub.s32 7, %v1742
    %v1744 = vrot.slane %v1721, %v1743
    %v1745 = vlaneseq
    %v1746 = vshrl.u32 %v1745, 7
    %v1747 = vsub.s32 7, %v1746
    %v1748 = vrot.slane %v1722, %v1747
    %v1749 = vlaneseq
    %v1750 = vshrl.u32 %v1749, 7
    %v1751 = vsub.s32 7, %v1750
    %v1752 = vrot.slane %v1723, %v1751
    %v1753 = vlaneseq
    %v1754 = vshrl.u32 %v1753, 7
    %v1755 = vsub.s32 7, %v1754
    %v1756 = vrot.slane %v1724, %v1755
    %v1757 = vmul.f32 %v1728, %v1716
    %v1758 = vmul.f32 %v1732, %v1716
    %v1759 = vmul.f32 %v1736, %v1716
    %v1760 = vmul.f32 %v1740, %v1716
    %v1761 = vmul.f32 %v1744, %v1716
    %v1762 = vmul.f32 %v1748, %v1716
    %v1763 = vmul.f32 %v1752, %v1716
    %v1764 = vmul.f32 %v1756, %v1716
    %v1765 = vsub.f32 %v1686, %v1757
    %v1766 = vsub.f32 %v1687, %v1758
    %v1767 = vsub.f32 %v1688, %v1759
    %v1768 = vsub.f32 %v1689, %v1760
    %v1769 = vsub.f32 %v1690, %v1761
    %v1770 = vsub.f32 %v1691, %v1762
    %v1771 = vsub.f32 %v1692, %v1763
    %v1772 = vsub.f32 %v1693, %v1764
    %1773 = vst [vmem:[#allocation5] sm:$0xff] %v911
    %1774 = vst [vmem:[#allocation5 + $0x8] sm:$0xff] %v912
    %1775 = vst [vmem:[#allocation5 + $0x10] sm:$0xff] %v913
    %1776 = vst [vmem:[#allocation5 + $0x18] sm:$0xff] %v914
    %1777 = vst [vmem:[#allocation5 + $0x20] sm:$0xff] %v915
    %1778 = vst [vmem:[#allocation5 + $0x28] sm:$0xff] %v916
    %1779 = vst [vmem:[#allocation5 + $0x30] sm:$0xff] %v917
    %1780 = vst [vmem:[#allocation5 + $0x38] sm:$0xff] %v918
    %s1781 = scalar_lea.vmem [#allocation5], 64
    %1782 = vst [vmem:[%s1781] sm:$0xff] %v1765
    %1783 = vst [vmem:[%s1781 + $0x8] sm:$0xff] %v1766
    %1784 = vst [vmem:[%s1781 + $0x10] sm:$0xff] %v1767
    %1785 = vst [vmem:[%s1781 + $0x18] sm:$0xff] %v1768
    %1786 = vst [vmem:[%s1781 + $0x20] sm:$0xff] %v1769
    %1787 = vst [vmem:[%s1781 + $0x28] sm:$0xff] %v1770
    %1788 = vst [vmem:[%s1781 + $0x30] sm:$0xff] %v1771
    %1789 = vst [vmem:[%s1781 + $0x38] sm:$0xff] %v1772
    // Predicated region
    $region10: #{tpu_custom_call.1} parent=1 // pred_check
      _
    $region11: #{tpu_custom_call.1} parent=1 // pred_check_branch
      %1791 = sbr.rel (0) target = $region13
    $region12: #{tpu_custom_call.1} parent=1 // pred_region
      %s1793 = ssub.s32 2048, 2048
      %1794 = vsyncadd [#allocation4], %s1793
      %s1795 = sshll.u32 [#allocation5], 4
      %s1796 = int_to_ptr.vmem [resolvable:$true] %s1795
      %1801 = dma.vmem_to_hbm [thread:$0]  %s1796, 2048, %s1, [#allocation4], 128, 128, 8
    $region13: #{tpu_custom_call.1} parent=1 // pred_fallthru
      _
    // Predicated region
    $region14: #{tpu_custom_call.1} parent=1 // pred_check
      _
    $region15: #{tpu_custom_call.1} parent=1 // pred_check_branch
      %1803 = sbr.rel (0) target = $region17
    $region16: #{tpu_custom_call.1} parent=1 // pred_region
      %1804 = dma.done [#allocation4], 2048
    $region17: #{tpu_custom_call.1} parent=1 // pred_fallthru
      _
    %1805 = vsyncpa [#allocation3], 1
    %1806 = vsyncpa [#allocation4], 1

</llo_original>
